<compile_context>
chip_gen: v5e
topology: v5e:2x2
jax: 0.10.0
libtpu: 0.0.40
codegen_flags: <defaults>
</compile_context>

<pallas_src>
import functools

import jax
import jax.numpy as jnp
from jax import lax
from jax.experimental import pallas as pl
from jax.experimental.pallas import tpu as pltpu


# ------------------------------ Pallas kernel --------------------------------

def _fused_lstm_fc_kernel(num_layers, hidden_size, seq_len, b_pad, b_real,
                          *refs):
    """Fused multi-layer LSTM + final Linear, fully VMEM-resident.

    refs layout (as passed by pallas_call):
      inputs : x_ref(T*Bp, D0),
               [w_ih(Din,4H), w_hh(H,4H), b(1,4H)] * num_layers,
               w_fc(H,O), b_fc(1,O)
      outputs: out_ref(B,O)
      scratch: gproj_sc(T*Bp, 4H)
    """
    H = hidden_size
    T = seq_len
    Bp = b_pad

    n_w = 3 * num_layers
    x_ref = refs[0]
    layer_refs = refs[1:1 + n_w]
    w_fc_ref = refs[1 + n_w]
    b_fc_ref = refs[2 + n_w]
    out_ref = refs[3 + n_w]
    gproj_sc = refs[4 + n_w]

    # ---- Layer-0 pre-pass: one tall MXU matmul over ALL timesteps at once. --
    # (T*Bp, D0) @ (D0, 4H) + bias, written straight into the gproj scratch.
    w_ih0 = layer_refs[0][...]
    b0 = layer_refs[2][...]
    gproj_sc[...] = (
        jnp.dot(x_ref[...], w_ih0, preferred_element_type=jnp.float32) + b0)

    # Bounded unroll: full unroll only for short sequences.
    unroll = T if T <= 32 else 8

    h_last = None
    for layer in range(num_layers):
        w_hh = layer_refs[3 * layer + 1][...]          # weight-stationary
        is_last = (layer == num_layers - 1)
        if is_last:
            w_ih_next = None
            b_next = None
        else:
            w_ih_next = layer_refs[3 * (layer + 1) + 0][...]
            b_next = layer_refs[3 * (layer + 1) + 2][...]

        def rec_body(t, carry, _w_hh=w_hh, _w_nx=w_ih_next, _b_nx=b_next,
                     _last=is_last):
            h, c = carry                               # (Bp, H) vreg carries
            row = t * Bp                               # Bp is a multiple of 8
            gates = gproj_sc[pl.ds(row, Bp), :] + jnp.dot(
                h, _w_hh, preferred_element_type=jnp.float32)
            # Activations on the full (Bp, 4H) vreg (2 EUP pushes), then slice.
            # (H=32 gate slices are not lane-aligned, so per-gate activations
            #  would cost extra relayouts; full-vreg EUP is cheaper here.)
            sg = jax.nn.sigmoid(gates)
            tg = jnp.tanh(gates)
            i_g = sg[:, 0 * H:1 * H]
            f_g = sg[:, 1 * H:2 * H]
            g_g = tg[:, 2 * H:3 * H]
            o_g = sg[:, 3 * H:4 * H]
            c_new = f_g * c + i_g * g_g
            h_new = o_g * jnp.tanh(c_new)
            if not _last:
                # Fused next-layer input projection: gproj[t] was already
                # consumed this step, so overwrite it in place.
                gproj_sc[pl.ds(row, Bp), :] = jnp.dot(
                    h_new, _w_nx, preferred_element_type=jnp.float32) + _b_nx
            return (h_new, c_new)

        h0 = jnp.zeros((Bp, H), jnp.float32)
        c0 = jnp.zeros((Bp, H), jnp.float32)
        h_last, _ = lax.fori_loop(0, T, rec_body, (h0, c0), unroll=unroll)

    # ---- Fused FC epilogue on the last timestep's hidden state. -------------
    out_full = (jnp.dot(h_last, w_fc_ref[...],
                        preferred_element_type=jnp.float32) + b_fc_ref[...])
    out_ref[...] = out_full[:b_real, :]


# -------------------------------- wrapper -------------------------------------

def lstm_forward(x, params):
    """x: (B, T, input_size), batch_first like the PyTorch module."""
    x = x.astype(jnp.float32)
    B, T, D_in0 = x.shape
    Bp = ((B + 7) // 8) * 8                       # pad batch to sublane multiple

    xt = jnp.transpose(x, (1, 0, 2))              # time-major (T, B, D0)
    if Bp != B:
        xt = jnp.pad(xt, ((0, 0), (0, Bp - B), (0, 0)))
    x_flat = xt.reshape(T * Bp, D_in0)            # flattened for batched prepass

    lstm_params = params["lstm"]
    num_layers = len(lstm_params)
    H = lstm_params[0][1].shape[0]
    w_fc, b_fc = params["fc"]["w"], params["fc"]["b"]
    O = w_fc.shape[1]

    inputs = [x_flat]
    in_specs = [pl.BlockSpec((T * Bp, D_in0), lambda: (0, 0))]
    flops = 0
    transcendentals = 0
    bytes_accessed = x_flat.size * 4 + B * O * 4
    for (w_ih, w_hh, b) in lstm_params:
        d_in = w_ih.shape[0]
        inputs += [w_ih, w_hh, b]
        in_specs += [
            pl.BlockSpec((d_in, 4 * H), lambda: (0, 0)),
            pl.BlockSpec((H, 4 * H), lambda: (0, 0)),
            pl.BlockSpec((1, 4 * H), lambda: (0, 0)),
        ]
        flops += 2 * T * Bp * (d_in + H) * 4 * H
        transcendentals += T * Bp * (4 * H + 4 * H + H)
        bytes_accessed += (w_ih.size + w_hh.size + b.size) * 4
    inputs += [w_fc, b_fc]
    in_specs += [pl.BlockSpec((H, O), lambda: (0, 0)),
                 pl.BlockSpec((1, O), lambda: (0, 0))]
    flops += 2 * Bp * H * O
    bytes_accessed += (w_fc.size + b_fc.size) * 4

    # VMEM budget: inputs/outputs (double-buffered) + gproj scratch + headroom.
    weight_bytes = sum((w_ih.size + w_hh.size + b.size)
                       for (w_ih, w_hh, b) in lstm_params) * 4
    weight_bytes += (w_fc.size + b_fc.size) * 4
    scratch_bytes = T * Bp * 4 * H * 4
    vmem_limit = int(min(64 << 20,
                         max(1 << 20,
                             2 * (x_flat.size * 4 + weight_bytes + B * O * 4)
                             + scratch_bytes + (1 << 20))))

    kernel = functools.partial(_fused_lstm_fc_kernel, num_layers, H, T, Bp, B)

    return pl.pallas_call(
        kernel,
        out_shape=jax.ShapeDtypeStruct((B, O), jnp.float32),
        in_specs=in_specs,
        out_specs=pl.BlockSpec((B, O), lambda: (0, 0)),
        scratch_shapes=[
            pltpu.VMEM((T * Bp, 4 * H), jnp.float32),   # hoisted/fused projections
        ],
        compiler_params=pltpu.CompilerParams(vmem_limit_bytes=vmem_limit),
        cost_estimate=pl.CostEstimate(flops=flops,
                                      transcendentals=transcendentals,
                                      bytes_accessed=bytes_accessed),
    )(*inputs)


# --------------------------- parameter init ----------------------------------

def init_params(key, input_size, hidden_size, num_layers, output_size):
    """Deterministic init matching PyTorch shapes; U(-1/sqrt(H), 1/sqrt(H))."""
    bound = 1.0 / jnp.sqrt(jnp.float32(hidden_size))
    params = {"lstm": []}
    for layer in range(num_layers):
        d_in = input_size if layer == 0 else hidden_size
        key, k1, k2, k3, k4 = jax.random.split(key, 5)
        w_ih = jax.random.uniform(k1, (d_in, 4 * hidden_size),
                                  jnp.float32, -bound, bound)
        w_hh = jax.random.uniform(k2, (hidden_size, 4 * hidden_size),
                                  jnp.float32, -bound, bound)
        b_ih = jax.random.uniform(k3, (4 * hidden_size,), jnp.float32, -bound, bound)
        b_hh = jax.random.uniform(k4, (4 * hidden_size,), jnp.float32, -bound, bound)
        params["lstm"].append((w_ih, w_hh, (b_ih + b_hh)[None, :]))
    key, k1, k2 = jax.random.split(key, 3)
    params["fc"] = {
        "w": jax.random.uniform(k1, (hidden_size, output_size),
                                jnp.float32, -bound, bound),
        "b": jax.random.uniform(k2, (1, output_size),
                                jnp.float32, -bound, bound),
    }
    return params


# --------------------------- pure-JAX reference -------------------------------

def lstm_reference(x, params):
    seq = jnp.transpose(x, (1, 0, 2)).astype(jnp.float32)   # (T, B, D)
    B = seq.shape[1]
    for (w_ih, w_hh, bias) in params["lstm"]:
        H = w_hh.shape[0]

        def step(carry, x_t):
            h, c = carry
            gates = x_t @ w_ih + h @ w_hh + bias
            i = jax.nn.sigmoid(gates[:, 0 * H:1 * H])
            f = jax.nn.sigmoid(gates[:, 1 * H:2 * H])
            g = jnp.tanh(gates[:, 2 * H:3 * H])
            o = jax.nn.sigmoid(gates[:, 3 * H:4 * H])
            c = f * c + i * g
            h = o * jnp.tanh(c)
            return (h, c), h

        init = (jnp.zeros((B, H), jnp.float32), jnp.zeros((B, H), jnp.float32))
        _, seq = jax.lax.scan(step, init, seq)
    return seq[-1] @ params["fc"]["w"] + params["fc"]["b"]


# ------------------------------------ main ------------------------------------

if __name__ == "__main__":
    hidden_size = 32
    num_layers = 2
    input_size = 4
    output_size = 1
    B, T = 2, 8

    key = jax.random.PRNGKey(0)
    key, pkey, xkey = jax.random.split(key, 3)
    params = init_params(pkey, input_size, hidden_size, num_layers, output_size)
    x = jax.random.normal(xkey, (B, T, input_size), jnp.float32)

    out = jax.block_until_ready(lstm_forward(x, params))
    ref = jax.block_until_ready(lstm_reference(x, params))

    assert out.shape == (B, output_size), out.shape
    assert jnp.allclose(out, ref, atol=1e-4, rtol=1e-4), (out, ref)
    print("KERNEL_OK")
</pallas_src>

<mosaic_0001>
module attributes {stable_mosaic.version = 11 : i64} {
  func.func @_fused_lstm_fc_kernel(%arg0: memref<64x4xf32, #tpu.memory_space<vmem>>, %arg1: memref<4x128xf32, #tpu.memory_space<vmem>>, %arg2: memref<32x128xf32, #tpu.memory_space<vmem>>, %arg3: memref<1x128xf32, #tpu.memory_space<vmem>>, %arg4: memref<32x128xf32, #tpu.memory_space<vmem>>, %arg5: memref<32x128xf32, #tpu.memory_space<vmem>>, %arg6: memref<1x128xf32, #tpu.memory_space<vmem>>, %arg7: memref<32x1xf32, #tpu.memory_space<vmem>>, %arg8: memref<1x1xf32, #tpu.memory_space<vmem>>, %arg9: memref<2x1xf32, #tpu.memory_space<vmem>>, %arg10: memref<64x128xf32, #tpu.memory_space<vmem>>) attributes {dimension_semantics = [], scalar_prefetch = 0 : i64, scratch_operands = 1 : i64, tpu.core_type = #tpu.core_type<tc>} {
    %c0 = arith.constant 0 : index
    %c0_0 = arith.constant 0 : index
    %0 = vector.load %arg1[%c0, %c0_0] : memref<4x128xf32, #tpu.memory_space<vmem>>, vector<4x128xf32>
    %c0_1 = arith.constant 0 : index
    %c0_2 = arith.constant 0 : index
    %1 = vector.load %arg3[%c0_1, %c0_2] : memref<1x128xf32, #tpu.memory_space<vmem>>, vector<1x128xf32>
    %c0_3 = arith.constant 0 : index
    %c0_4 = arith.constant 0 : index
    %2 = vector.load %arg0[%c0_3, %c0_4] : memref<64x4xf32, #tpu.memory_space<vmem>>, vector<64x4xf32>
    %cst = arith.constant dense<0.000000e+00> : vector<64x128xf32>
    %3 = tpu.matmul %2, %0, %cst {dimension_numbers = #tpu.dot_dimension_numbers<[1], [0], [0], [1], [0, 0, 1, 1], [], []>} : vector<64x4xf32>, vector<4x128xf32>, vector<64x128xf32> -> vector<64x128xf32>
    %4 = vector.broadcast %1 : vector<1x128xf32> to vector<64x128xf32>
    %5 = arith.addf %3, %4 : vector<64x128xf32>
    %c0_5 = arith.constant 0 : index
    %c0_6 = arith.constant 0 : index
    %6 = vector.load %arg10[%c0_5, %c0_6] : memref<64x128xf32, #tpu.memory_space<vmem>>, vector<64x128xf32>
    tpu.vector_store %arg10[%c0_5, %c0_6], %5 {strides = array<i32>} : memref<64x128xf32, #tpu.memory_space<vmem>>, vector<64x128xf32>,
    %c0_7 = arith.constant 0 : index
    %c0_8 = arith.constant 0 : index
    %7 = vector.load %arg2[%c0_7, %c0_8] : memref<32x128xf32, #tpu.memory_space<vmem>>, vector<32x128xf32>
    %c0_9 = arith.constant 0 : index
    %c0_10 = arith.constant 0 : index
    %8 = vector.load %arg4[%c0_9, %c0_10] : memref<32x128xf32, #tpu.memory_space<vmem>>, vector<32x128xf32>
    %c0_11 = arith.constant 0 : index
    %c0_12 = arith.constant 0 : index
    %9 = vector.load %arg6[%c0_11, %c0_12] : memref<1x128xf32, #tpu.memory_space<vmem>>, vector<1x128xf32>
    %cst_13 = arith.constant 0.000000e+00 : f32
    %10 = vector.broadcast %cst_13 : f32 to vector<8x32xf32>
    %cst_14 = arith.constant 0.000000e+00 : f32
    %11 = vector.broadcast %cst_14 : f32 to vector<8x32xf32>
    %c0_i32 = arith.constant 0 : i32
    %c8_i32 = arith.constant 8 : i32
    %12 = arith.muli %c0_i32, %c8_i32 : i32
    %13 = arith.index_cast %12 : i32 to index
    %c0_15 = arith.constant 0 : index
    %14 = vector.load %arg10[%13, %c0_15] : memref<64x128xf32, #tpu.memory_space<vmem>>, vector<8x128xf32>
    %cst_16 = arith.constant dense<0.000000e+00> : vector<8x128xf32>
    %15 = tpu.matmul %10, %7, %cst_16 {dimension_numbers = #tpu.dot_dimension_numbers<[1], [0], [0], [1], [0, 0, 1, 1], [], []>} : vector<8x32xf32>, vector<32x128xf32>, vector<8x128xf32> -> vector<8x128xf32>
    %16 = arith.addf %14, %15 : vector<8x128xf32>
    %17 = arith.negf %16 : vector<8x128xf32>
    %18 = math.exp %17 : vector<8x128xf32>
    %cst_17 = arith.constant 1.000000e+00 : f32
    %19 = vector.broadcast %cst_17 : f32 to vector<8x128xf32>
    %20 = arith.addf %19, %18 : vector<8x128xf32>
    %21 = arith.divf %19, %20 : vector<8x128xf32>
    %22 = math.tanh %16 : vector<8x128xf32>
    %23 = vector.extract_strided_slice %21 {offsets = [0, 0], sizes = [8, 32], strides = [1, 1]} : vector<8x128xf32> to vector<8x32xf32>
    %24 = vector.extract_strided_slice %21 {offsets = [0, 32], sizes = [8, 32], strides = [1, 1]} : vector<8x128xf32> to vector<8x32xf32>
    %25 = vector.extract_strided_slice %22 {offsets = [0, 64], sizes = [8, 32], strides = [1, 1]} : vector<8x128xf32> to vector<8x32xf32>
    %26 = vector.extract_strided_slice %21 {offsets = [0, 96], sizes = [8, 32], strides = [1, 1]} : vector<8x128xf32> to vector<8x32xf32>
    %27 = arith.mulf %24, %11 : vector<8x32xf32>
    %28 = arith.mulf %23, %25 : vector<8x32xf32>
    %29 = arith.addf %27, %28 : vector<8x32xf32>
    %30 = math.tanh %29 : vector<8x32xf32>
    %31 = arith.mulf %26, %30 : vector<8x32xf32>
    %cst_18 = arith.constant dense<0.000000e+00> : vector<8x128xf32>
    %32 = tpu.matmul %31, %8, %cst_18 {dimension_numbers = #tpu.dot_dimension_numbers<[1], [0], [0], [1], [0, 0, 1, 1], [], []>} : vector<8x32xf32>, vector<32x128xf32>, vector<8x128xf32> -> vector<8x128xf32>
    %33 = vector.broadcast %9 : vector<1x128xf32> to vector<8x128xf32>
    %34 = arith.addf %32, %33 : vector<8x128xf32>
    %35 = arith.index_cast %12 : i32 to index
    %c0_19 = arith.constant 0 : index
    %36 = vector.load %arg10[%35, %c0_19] : memref<64x128xf32, #tpu.memory_space<vmem>>, vector<8x128xf32>
    tpu.vector_store %arg10[%35, %c0_19], %34 {strides = array<i32>} : memref<64x128xf32, #tpu.memory_space<vmem>>, vector<8x128xf32>,
    %c1_i32 = arith.constant 1 : i32
    %c8_i32_20 = arith.constant 8 : i32
    %37 = arith.muli %c1_i32, %c8_i32_20 : i32
    %38 = arith.index_cast %37 : i32 to index
    %c0_21 = arith.constant 0 : index
    %39 = vector.load %arg10[%38, %c0_21] : memref<64x128xf32, #tpu.memory_space<vmem>>, vector<8x128xf32>
    %cst_22 = arith.constant dense<0.000000e+00> : vector<8x128xf32>
    %40 = tpu.matmul %31, %7, %cst_22 {dimension_numbers = #tpu.dot_dimension_numbers<[1], [0], [0], [1], [0, 0, 1, 1], [], []>} : vector<8x32xf32>, vector<32x128xf32>, vector<8x128xf32> -> vector<8x128xf32>
    %41 = arith.addf %39, %40 : vector<8x128xf32>
    %42 = arith.negf %41 : vector<8x128xf32>
    %43 = math.exp %42 : vector<8x128xf32>
    %cst_23 = arith.constant 1.000000e+00 : f32
    %44 = vector.broadcast %cst_23 : f32 to vector<8x128xf32>
    %45 = arith.addf %44, %43 : vector<8x128xf32>
    %46 = arith.divf %44, %45 : vector<8x128xf32>
    %47 = math.tanh %41 : vector<8x128xf32>
    %48 = vector.extract_strided_slice %46 {offsets = [0, 0], sizes = [8, 32], strides = [1, 1]} : vector<8x128xf32> to vector<8x32xf32>
    %49 = vector.extract_strided_slice %46 {offsets = [0, 32], sizes = [8, 32], strides = [1, 1]} : vector<8x128xf32> to vector<8x32xf32>
    %50 = vector.extract_strided_slice %47 {offsets = [0, 64], sizes = [8, 32], strides = [1, 1]} : vector<8x128xf32> to vector<8x32xf32>
    %51 = vector.extract_strided_slice %46 {offsets = [0, 96], sizes = [8, 32], strides = [1, 1]} : vector<8x128xf32> to vector<8x32xf32>
    %52 = arith.mulf %49, %29 : vector<8x32xf32>
    %53 = arith.mulf %48, %50 : vector<8x32xf32>
    %54 = arith.addf %52, %53 : vector<8x32xf32>
    %55 = math.tanh %54 : vector<8x32xf32>
    %56 = arith.mulf %51, %55 : vector<8x32xf32>
    %cst_24 = arith.constant dense<0.000000e+00> : vector<8x128xf32>
    %57 = tpu.matmul %56, %8, %cst_24 {dimension_numbers = #tpu.dot_dimension_numbers<[1], [0], [0], [1], [0, 0, 1, 1], [], []>} : vector<8x32xf32>, vector<32x128xf32>, vector<8x128xf32> -> vector<8x128xf32>
    %58 = vector.broadcast %9 : vector<1x128xf32> to vector<8x128xf32>
    %59 = arith.addf %57, %58 : vector<8x128xf32>
    %60 = arith.index_cast %37 : i32 to index
    %c0_25 = arith.constant 0 : index
    %61 = vector.load %arg10[%60, %c0_25] : memref<64x128xf32, #tpu.memory_space<vmem>>, vector<8x128xf32>
    tpu.vector_store %arg10[%60, %c0_25], %59 {strides = array<i32>} : memref<64x128xf32, #tpu.memory_space<vmem>>, vector<8x128xf32>,
    %c2_i32 = arith.constant 2 : i32
    %c8_i32_26 = arith.constant 8 : i32
    %62 = arith.muli %c2_i32, %c8_i32_26 : i32
    %63 = arith.index_cast %62 : i32 to index
    %c0_27 = arith.constant 0 : index
    %64 = vector.load %arg10[%63, %c0_27] : memref<64x128xf32, #tpu.memory_space<vmem>>, vector<8x128xf32>
    %cst_28 = arith.constant dense<0.000000e+00> : vector<8x128xf32>
    %65 = tpu.matmul %56, %7, %cst_28 {dimension_numbers = #tpu.dot_dimension_numbers<[1], [0], [0], [1], [0, 0, 1, 1], [], []>} : vector<8x32xf32>, vector<32x128xf32>, vector<8x128xf32> -> vector<8x128xf32>
    %66 = arith.addf %64, %65 : vector<8x128xf32>
    %67 = arith.negf %66 : vector<8x128xf32>
    %68 = math.exp %67 : vector<8x128xf32>
    %cst_29 = arith.constant 1.000000e+00 : f32
    %69 = vector.broadcast %cst_29 : f32 to vector<8x128xf32>
    %70 = arith.addf %69, %68 : vector<8x128xf32>
    %71 = arith.divf %69, %70 : vector<8x128xf32>
    %72 = math.tanh %66 : vector<8x128xf32>
    %73 = vector.extract_strided_slice %71 {offsets = [0, 0], sizes = [8, 32], strides = [1, 1]} : vector<8x128xf32> to vector<8x32xf32>
    %74 = vector.extract_strided_slice %71 {offsets = [0, 32], sizes = [8, 32], strides = [1, 1]} : vector<8x128xf32> to vector<8x32xf32>
    %75 = vector.extract_strided_slice %72 {offsets = [0, 64], sizes = [8, 32], strides = [1, 1]} : vector<8x128xf32> to vector<8x32xf32>
    %76 = vector.extract_strided_slice %71 {offsets = [0, 96], sizes = [8, 32], strides = [1, 1]} : vector<8x128xf32> to vector<8x32xf32>
    %77 = arith.mulf %74, %54 : vector<8x32xf32>
    %78 = arith.mulf %73, %75 : vector<8x32xf32>
    %79 = arith.addf %77, %78 : vector<8x32xf32>
    %80 = math.tanh %79 : vector<8x32xf32>
    %81 = arith.mulf %76, %80 : vector<8x32xf32>
    %cst_30 = arith.constant dense<0.000000e+00> : vector<8x128xf32>
    %82 = tpu.matmul %81, %8, %cst_30 {dimension_numbers = #tpu.dot_dimension_numbers<[1], [0], [0], [1], [0, 0, 1, 1], [], []>} : vector<8x32xf32>, vector<32x128xf32>, vector<8x128xf32> -> vector<8x128xf32>
    %83 = vector.broadcast %9 : vector<1x128xf32> to vector<8x128xf32>
    %84 = arith.addf %82, %83 : vector<8x128xf32>
    %85 = arith.index_cast %62 : i32 to index
    %c0_31 = arith.constant 0 : index
    %86 = vector.load %arg10[%85, %c0_31] : memref<64x128xf32, #tpu.memory_space<vmem>>, vector<8x128xf32>
    tpu.vector_store %arg10[%85, %c0_31], %84 {strides = array<i32>} : memref<64x128xf32, #tpu.memory_space<vmem>>, vector<8x128xf32>,
    %c3_i32 = arith.constant 3 : i32
    %c8_i32_32 = arith.constant 8 : i32
    %87 = arith.muli %c3_i32, %c8_i32_32 : i32
    %88 = arith.index_cast %87 : i32 to index
    %c0_33 = arith.constant 0 : index
    %89 = vector.load %arg10[%88, %c0_33] : memref<64x128xf32, #tpu.memory_space<vmem>>, vector<8x128xf32>
    %cst_34 = arith.constant dense<0.000000e+00> : vector<8x128xf32>
    %90 = tpu.matmul %81, %7, %cst_34 {dimension_numbers = #tpu.dot_dimension_numbers<[1], [0], [0], [1], [0, 0, 1, 1], [], []>} : vector<8x32xf32>, vector<32x128xf32>, vector<8x128xf32> -> vector<8x128xf32>
    %91 = arith.addf %89, %90 : vector<8x128xf32>
    %92 = arith.negf %91 : vector<8x128xf32>
    %93 = math.exp %92 : vector<8x128xf32>
    %cst_35 = arith.constant 1.000000e+00 : f32
    %94 = vector.broadcast %cst_35 : f32 to vector<8x128xf32>
    %95 = arith.addf %94, %93 : vector<8x128xf32>
    %96 = arith.divf %94, %95 : vector<8x128xf32>
    %97 = math.tanh %91 : vector<8x128xf32>
    %98 = vector.extract_strided_slice %96 {offsets = [0, 0], sizes = [8, 32], strides = [1, 1]} : vector<8x128xf32> to vector<8x32xf32>
    %99 = vector.extract_strided_slice %96 {offsets = [0, 32], sizes = [8, 32], strides = [1, 1]} : vector<8x128xf32> to vector<8x32xf32>
    %100 = vector.extract_strided_slice %97 {offsets = [0, 64], sizes = [8, 32], strides = [1, 1]} : vector<8x128xf32> to vector<8x32xf32>
    %101 = vector.extract_strided_slice %96 {offsets = [0, 96], sizes = [8, 32], strides = [1, 1]} : vector<8x128xf32> to vector<8x32xf32>
    %102 = arith.mulf %99, %79 : vector<8x32xf32>
    %103 = arith.mulf %98, %100 : vector<8x32xf32>
    %104 = arith.addf %102, %103 : vector<8x32xf32>
    %105 = math.tanh %104 : vector<8x32xf32>
    %106 = arith.mulf %101, %105 : vector<8x32xf32>
    %cst_36 = arith.constant dense<0.000000e+00> : vector<8x128xf32>
    %107 = tpu.matmul %106, %8, %cst_36 {dimension_numbers = #tpu.dot_dimension_numbers<[1], [0], [0], [1], [0, 0, 1, 1], [], []>} : vector<8x32xf32>, vector<32x128xf32>, vector<8x128xf32> -> vector<8x128xf32>
    %108 = vector.broadcast %9 : vector<1x128xf32> to vector<8x128xf32>
    %109 = arith.addf %107, %108 : vector<8x128xf32>
    %110 = arith.index_cast %87 : i32 to index
    %c0_37 = arith.constant 0 : index
    %111 = vector.load %arg10[%110, %c0_37] : memref<64x128xf32, #tpu.memory_space<vmem>>, vector<8x128xf32>
    tpu.vector_store %arg10[%110, %c0_37], %109 {strides = array<i32>} : memref<64x128xf32, #tpu.memory_space<vmem>>, vector<8x128xf32>,
    %c4_i32 = arith.constant 4 : i32
    %c8_i32_38 = arith.constant 8 : i32
    %112 = arith.muli %c4_i32, %c8_i32_38 : i32
    %113 = arith.index_cast %112 : i32 to index
    %c0_39 = arith.constant 0 : index
    %114 = vector.load %arg10[%113, %c0_39] : memref<64x128xf32, #tpu.memory_space<vmem>>, vector<8x128xf32>
    %cst_40 = arith.constant dense<0.000000e+00> : vector<8x128xf32>
    %115 = tpu.matmul %106, %7, %cst_40 {dimension_numbers = #tpu.dot_dimension_numbers<[1], [0], [0], [1], [0, 0, 1, 1], [], []>} : vector<8x32xf32>, vector<32x128xf32>, vector<8x128xf32> -> vector<8x128xf32>
    %116 = arith.addf %114, %115 : vector<8x128xf32>
    %117 = arith.negf %116 : vector<8x128xf32>
    %118 = math.exp %117 : vector<8x128xf32>
    %cst_41 = arith.constant 1.000000e+00 : f32
    %119 = vector.broadcast %cst_41 : f32 to vector<8x128xf32>
    %120 = arith.addf %119, %118 : vector<8x128xf32>
    %121 = arith.divf %119, %120 : vector<8x128xf32>
    %122 = math.tanh %116 : vector<8x128xf32>
    %123 = vector.extract_strided_slice %121 {offsets = [0, 0], sizes = [8, 32], strides = [1, 1]} : vector<8x128xf32> to vector<8x32xf32>
    %124 = vector.extract_strided_slice %121 {offsets = [0, 32], sizes = [8, 32], strides = [1, 1]} : vector<8x128xf32> to vector<8x32xf32>
    %125 = vector.extract_strided_slice %122 {offsets = [0, 64], sizes = [8, 32], strides = [1, 1]} : vector<8x128xf32> to vector<8x32xf32>
    %126 = vector.extract_strided_slice %121 {offsets = [0, 96], sizes = [8, 32], strides = [1, 1]} : vector<8x128xf32> to vector<8x32xf32>
    %127 = arith.mulf %124, %104 : vector<8x32xf32>
    %128 = arith.mulf %123, %125 : vector<8x32xf32>
    %129 = arith.addf %127, %128 : vector<8x32xf32>
    %130 = math.tanh %129 : vector<8x32xf32>
    %131 = arith.mulf %126, %130 : vector<8x32xf32>
    %cst_42 = arith.constant dense<0.000000e+00> : vector<8x128xf32>
    %132 = tpu.matmul %131, %8, %cst_42 {dimension_numbers = #tpu.dot_dimension_numbers<[1], [0], [0], [1], [0, 0, 1, 1], [], []>} : vector<8x32xf32>, vector<32x128xf32>, vector<8x128xf32> -> vector<8x128xf32>
    %133 = vector.broadcast %9 : vector<1x128xf32> to vector<8x128xf32>
    %134 = arith.addf %132, %133 : vector<8x128xf32>
    %135 = arith.index_cast %112 : i32 to index
    %c0_43 = arith.constant 0 : index
    %136 = vector.load %arg10[%135, %c0_43] : memref<64x128xf32, #tpu.memory_space<vmem>>, vector<8x128xf32>
    tpu.vector_store %arg10[%135, %c0_43], %134 {strides = array<i32>} : memref<64x128xf32, #tpu.memory_space<vmem>>, vector<8x128xf32>,
    %c5_i32 = arith.constant 5 : i32
    %c8_i32_44 = arith.constant 8 : i32
    %137 = arith.muli %c5_i32, %c8_i32_44 : i32
    %138 = arith.index_cast %137 : i32 to index
    %c0_45 = arith.constant 0 : index
    %139 = vector.load %arg10[%138, %c0_45] : memref<64x128xf32, #tpu.memory_space<vmem>>, vector<8x128xf32>
    %cst_46 = arith.constant dense<0.000000e+00> : vector<8x128xf32>
    %140 = tpu.matmul %131, %7, %cst_46 {dimension_numbers = #tpu.dot_dimension_numbers<[1], [0], [0], [1], [0, 0, 1, 1], [], []>} : vector<8x32xf32>, vector<32x128xf32>, vector<8x128xf32> -> vector<8x128xf32>
    %141 = arith.addf %139, %140 : vector<8x128xf32>
    %142 = arith.negf %141 : vector<8x128xf32>
    %143 = math.exp %142 : vector<8x128xf32>
    %cst_47 = arith.constant 1.000000e+00 : f32
    %144 = vector.broadcast %cst_47 : f32 to vector<8x128xf32>
    %145 = arith.addf %144, %143 : vector<8x128xf32>
    %146 = arith.divf %144, %145 : vector<8x128xf32>
    %147 = math.tanh %141 : vector<8x128xf32>
    %148 = vector.extract_strided_slice %146 {offsets = [0, 0], sizes = [8, 32], strides = [1, 1]} : vector<8x128xf32> to vector<8x32xf32>
    %149 = vector.extract_strided_slice %146 {offsets = [0, 32], sizes = [8, 32], strides = [1, 1]} : vector<8x128xf32> to vector<8x32xf32>
    %150 = vector.extract_strided_slice %147 {offsets = [0, 64], sizes = [8, 32], strides = [1, 1]} : vector<8x128xf32> to vector<8x32xf32>
    %151 = vector.extract_strided_slice %146 {offsets = [0, 96], sizes = [8, 32], strides = [1, 1]} : vector<8x128xf32> to vector<8x32xf32>
    %152 = arith.mulf %149, %129 : vector<8x32xf32>
    %153 = arith.mulf %148, %150 : vector<8x32xf32>
    %154 = arith.addf %152, %153 : vector<8x32xf32>
    %155 = math.tanh %154 : vector<8x32xf32>
    %156 = arith.mulf %151, %155 : vector<8x32xf32>
    %cst_48 = arith.constant dense<0.000000e+00> : vector<8x128xf32>
    %157 = tpu.matmul %156, %8, %cst_48 {dimension_numbers = #tpu.dot_dimension_numbers<[1], [0], [0], [1], [0, 0, 1, 1], [], []>} : vector<8x32xf32>, vector<32x128xf32>, vector<8x128xf32> -> vector<8x128xf32>
    %158 = vector.broadcast %9 : vector<1x128xf32> to vector<8x128xf32>
    %159 = arith.addf %157, %158 : vector<8x128xf32>
    %160 = arith.index_cast %137 : i32 to index
    %c0_49 = arith.constant 0 : index
    %161 = vector.load %arg10[%160, %c0_49] : memref<64x128xf32, #tpu.memory_space<vmem>>, vector<8x128xf32>
    tpu.vector_store %arg10[%160, %c0_49], %159 {strides = array<i32>} : memref<64x128xf32, #tpu.memory_space<vmem>>, vector<8x128xf32>,
    %c6_i32 = arith.constant 6 : i32
    %c8_i32_50 = arith.constant 8 : i32
    %162 = arith.muli %c6_i32, %c8_i32_50 : i32
    %163 = arith.index_cast %162 : i32 to index
    %c0_51 = arith.constant 0 : index
    %164 = vector.load %arg10[%163, %c0_51] : memref<64x128xf32, #tpu.memory_space<vmem>>, vector<8x128xf32>
    %cst_52 = arith.constant dense<0.000000e+00> : vector<8x128xf32>
    %165 = tpu.matmul %156, %7, %cst_52 {dimension_numbers = #tpu.dot_dimension_numbers<[1], [0], [0], [1], [0, 0, 1, 1], [], []>} : vector<8x32xf32>, vector<32x128xf32>, vector<8x128xf32> -> vector<8x128xf32>
    %166 = arith.addf %164, %165 : vector<8x128xf32>
    %167 = arith.negf %166 : vector<8x128xf32>
    %168 = math.exp %167 : vector<8x128xf32>
    %cst_53 = arith.constant 1.000000e+00 : f32
    %169 = vector.broadcast %cst_53 : f32 to vector<8x128xf32>
    %170 = arith.addf %169, %168 : vector<8x128xf32>
    %171 = arith.divf %169, %170 : vector<8x128xf32>
    %172 = math.tanh %166 : vector<8x128xf32>
    %173 = vector.extract_strided_slice %171 {offsets = [0, 0], sizes = [8, 32], strides = [1, 1]} : vector<8x128xf32> to vector<8x32xf32>
    %174 = vector.extract_strided_slice %171 {offsets = [0, 32], sizes = [8, 32], strides = [1, 1]} : vector<8x128xf32> to vector<8x32xf32>
    %175 = vector.extract_strided_slice %172 {offsets = [0, 64], sizes = [8, 32], strides = [1, 1]} : vector<8x128xf32> to vector<8x32xf32>
    %176 = vector.extract_strided_slice %171 {offsets = [0, 96], sizes = [8, 32], strides = [1, 1]} : vector<8x128xf32> to vector<8x32xf32>
    %177 = arith.mulf %174, %154 : vector<8x32xf32>
    %178 = arith.mulf %173, %175 : vector<8x32xf32>
    %179 = arith.addf %177, %178 : vector<8x32xf32>
    %180 = math.tanh %179 : vector<8x32xf32>
    %181 = arith.mulf %176, %180 : vector<8x32xf32>
    %cst_54 = arith.constant dense<0.000000e+00> : vector<8x128xf32>
    %182 = tpu.matmul %181, %8, %cst_54 {dimension_numbers = #tpu.dot_dimension_numbers<[1], [0], [0], [1], [0, 0, 1, 1], [], []>} : vector<8x32xf32>, vector<32x128xf32>, vector<8x128xf32> -> vector<8x128xf32>
    %183 = vector.broadcast %9 : vector<1x128xf32> to vector<8x128xf32>
    %184 = arith.addf %182, %183 : vector<8x128xf32>
    %185 = arith.index_cast %162 : i32 to index
    %c0_55 = arith.constant 0 : index
    %186 = vector.load %arg10[%185, %c0_55] : memref<64x128xf32, #tpu.memory_space<vmem>>, vector<8x128xf32>
    tpu.vector_store %arg10[%185, %c0_55], %184 {strides = array<i32>} : memref<64x128xf32, #tpu.memory_space<vmem>>, vector<8x128xf32>,
    %c7_i32 = arith.constant 7 : i32
    %c8_i32_56 = arith.constant 8 : i32
    %187 = arith.muli %c7_i32, %c8_i32_56 : i32
    %188 = arith.index_cast %187 : i32 to index
    %c0_57 = arith.constant 0 : index
    %189 = vector.load %arg10[%188, %c0_57] : memref<64x128xf32, #tpu.memory_space<vmem>>, vector<8x128xf32>
    %cst_58 = arith.constant dense<0.000000e+00> : vector<8x128xf32>
    %190 = tpu.matmul %181, %7, %cst_58 {dimension_numbers = #tpu.dot_dimension_numbers<[1], [0], [0], [1], [0, 0, 1, 1], [], []>} : vector<8x32xf32>, vector<32x128xf32>, vector<8x128xf32> -> vector<8x128xf32>
    %191 = arith.addf %189, %190 : vector<8x128xf32>
    %192 = arith.negf %191 : vector<8x128xf32>
    %193 = math.exp %192 : vector<8x128xf32>
    %cst_59 = arith.constant 1.000000e+00 : f32
    %194 = vector.broadcast %cst_59 : f32 to vector<8x128xf32>
    %195 = arith.addf %194, %193 : vector<8x128xf32>
    %196 = arith.divf %194, %195 : vector<8x128xf32>
    %197 = math.tanh %191 : vector<8x128xf32>
    %198 = vector.extract_strided_slice %196 {offsets = [0, 0], sizes = [8, 32], strides = [1, 1]} : vector<8x128xf32> to vector<8x32xf32>
    %199 = vector.extract_strided_slice %196 {offsets = [0, 32], sizes = [8, 32], strides = [1, 1]} : vector<8x128xf32> to vector<8x32xf32>
    %200 = vector.extract_strided_slice %197 {offsets = [0, 64], sizes = [8, 32], strides = [1, 1]} : vector<8x128xf32> to vector<8x32xf32>
    %201 = vector.extract_strided_slice %196 {offsets = [0, 96], sizes = [8, 32], strides = [1, 1]} : vector<8x128xf32> to vector<8x32xf32>
    %202 = arith.mulf %199, %179 : vector<8x32xf32>
    %203 = arith.mulf %198, %200 : vector<8x32xf32>
    %204 = arith.addf %202, %203 : vector<8x32xf32>
    %205 = math.tanh %204 : vector<8x32xf32>
    %206 = arith.mulf %201, %205 : vector<8x32xf32>
    %cst_60 = arith.constant dense<0.000000e+00> : vector<8x128xf32>
    %207 = tpu.matmul %206, %8, %cst_60 {dimension_numbers = #tpu.dot_dimension_numbers<[1], [0], [0], [1], [0, 0, 1, 1], [], []>} : vector<8x32xf32>, vector<32x128xf32>, vector<8x128xf32> -> vector<8x128xf32>
    %208 = vector.broadcast %9 : vector<1x128xf32> to vector<8x128xf32>
    %209 = arith.addf %207, %208 : vector<8x128xf32>
    %210 = arith.index_cast %187 : i32 to index
    %c0_61 = arith.constant 0 : index
    %211 = vector.load %arg10[%210, %c0_61] : memref<64x128xf32, #tpu.memory_space<vmem>>, vector<8x128xf32>
    tpu.vector_store %arg10[%210, %c0_61], %209 {strides = array<i32>} : memref<64x128xf32, #tpu.memory_space<vmem>>, vector<8x128xf32>,
    %c8_i32_62 = arith.constant 8 : i32
    %c0_63 = arith.constant 0 : index
    %c0_64 = arith.constant 0 : index
    %212 = vector.load %arg5[%c0_63, %c0_64] : memref<32x128xf32, #tpu.memory_space<vmem>>, vector<32x128xf32>
    %cst_65 = arith.constant 0.000000e+00 : f32
    %213 = vector.broadcast %cst_65 : f32 to vector<8x32xf32>
    %cst_66 = arith.constant 0.000000e+00 : f32
    %214 = vector.broadcast %cst_66 : f32 to vector<8x32xf32>
    %c0_i32_67 = arith.constant 0 : i32
    %c8_i32_68 = arith.constant 8 : i32
    %215 = arith.muli %c0_i32_67, %c8_i32_68 : i32
    %216 = arith.index_cast %215 : i32 to index
    %c0_69 = arith.constant 0 : index
    %217 = vector.load %arg10[%216, %c0_69] : memref<64x128xf32, #tpu.memory_space<vmem>>, vector<8x128xf32>
    %cst_70 = arith.constant dense<0.000000e+00> : vector<8x128xf32>
    %218 = tpu.matmul %213, %212, %cst_70 {dimension_numbers = #tpu.dot_dimension_numbers<[1], [0], [0], [1], [0, 0, 1, 1], [], []>} : vector<8x32xf32>, vector<32x128xf32>, vector<8x128xf32> -> vector<8x128xf32>
    %219 = arith.addf %217, %218 : vector<8x128xf32>
    %220 = arith.negf %219 : vector<8x128xf32>
    %221 = math.exp %220 : vector<8x128xf32>
    %cst_71 = arith.constant 1.000000e+00 : f32
    %222 = vector.broadcast %cst_71 : f32 to vector<8x128xf32>
    %223 = arith.addf %222, %221 : vector<8x128xf32>
    %224 = arith.divf %222, %223 : vector<8x128xf32>
    %225 = math.tanh %219 : vector<8x128xf32>
    %226 = vector.extract_strided_slice %224 {offsets = [0, 0], sizes = [8, 32], strides = [1, 1]} : vector<8x128xf32> to vector<8x32xf32>
    %227 = vector.extract_strided_slice %224 {offsets = [0, 32], sizes = [8, 32], strides = [1, 1]} : vector<8x128xf32> to vector<8x32xf32>
    %228 = vector.extract_strided_slice %225 {offsets = [0, 64], sizes = [8, 32], strides = [1, 1]} : vector<8x128xf32> to vector<8x32xf32>
    %229 = vector.extract_strided_slice %224 {offsets = [0, 96], sizes = [8, 32], strides = [1, 1]} : vector<8x128xf32> to vector<8x32xf32>
    %230 = arith.mulf %227, %214 : vector<8x32xf32>
    %231 = arith.mulf %226, %228 : vector<8x32xf32>
    %232 = arith.addf %230, %231 : vector<8x32xf32>
    %233 = math.tanh %232 : vector<8x32xf32>
    %234 = arith.mulf %229, %233 : vector<8x32xf32>
    %c1_i32_72 = arith.constant 1 : i32
    %c8_i32_73 = arith.constant 8 : i32
    %235 = arith.muli %c1_i32_72, %c8_i32_73 : i32
    %236 = arith.index_cast %235 : i32 to index
    %c0_74 = arith.constant 0 : index
    %237 = vector.load %arg10[%236, %c0_74] : memref<64x128xf32, #tpu.memory_space<vmem>>, vector<8x128xf32>
    %cst_75 = arith.constant dense<0.000000e+00> : vector<8x128xf32>
    %238 = tpu.matmul %234, %212, %cst_75 {dimension_numbers = #tpu.dot_dimension_numbers<[1], [0], [0], [1], [0, 0, 1, 1], [], []>} : vector<8x32xf32>, vector<32x128xf32>, vector<8x128xf32> -> vector<8x128xf32>
    %239 = arith.addf %237, %238 : vector<8x128xf32>
    %240 = arith.negf %239 : vector<8x128xf32>
    %241 = math.exp %240 : vector<8x128xf32>
    %cst_76 = arith.constant 1.000000e+00 : f32
    %242 = vector.broadcast %cst_76 : f32 to vector<8x128xf32>
    %243 = arith.addf %242, %241 : vector<8x128xf32>
    %244 = arith.divf %242, %243 : vector<8x128xf32>
    %245 = math.tanh %239 : vector<8x128xf32>
    %246 = vector.extract_strided_slice %244 {offsets = [0, 0], sizes = [8, 32], strides = [1, 1]} : vector<8x128xf32> to vector<8x32xf32>
    %247 = vector.extract_strided_slice %244 {offsets = [0, 32], sizes = [8, 32], strides = [1, 1]} : vector<8x128xf32> to vector<8x32xf32>
    %248 = vector.extract_strided_slice %245 {offsets = [0, 64], sizes = [8, 32], strides = [1, 1]} : vector<8x128xf32> to vector<8x32xf32>
    %249 = vector.extract_strided_slice %244 {offsets = [0, 96], sizes = [8, 32], strides = [1, 1]} : vector<8x128xf32> to vector<8x32xf32>
    %250 = arith.mulf %247, %232 : vector<8x32xf32>
    %251 = arith.mulf %246, %248 : vector<8x32xf32>
    %252 = arith.addf %250, %251 : vector<8x32xf32>
    %253 = math.tanh %252 : vector<8x32xf32>
    %254 = arith.mulf %249, %253 : vector<8x32xf32>
    %c2_i32_77 = arith.constant 2 : i32
    %c8_i32_78 = arith.constant 8 : i32
    %255 = arith.muli %c2_i32_77, %c8_i32_78 : i32
    %256 = arith.index_cast %255 : i32 to index
    %c0_79 = arith.constant 0 : index
    %257 = vector.load %arg10[%256, %c0_79] : memref<64x128xf32, #tpu.memory_space<vmem>>, vector<8x128xf32>
    %cst_80 = arith.constant dense<0.000000e+00> : vector<8x128xf32>
    %258 = tpu.matmul %254, %212, %cst_80 {dimension_numbers = #tpu.dot_dimension_numbers<[1], [0], [0], [1], [0, 0, 1, 1], [], []>} : vector<8x32xf32>, vector<32x128xf32>, vector<8x128xf32> -> vector<8x128xf32>
    %259 = arith.addf %257, %258 : vector<8x128xf32>
    %260 = arith.negf %259 : vector<8x128xf32>
    %261 = math.exp %260 : vector<8x128xf32>
    %cst_81 = arith.constant 1.000000e+00 : f32
    %262 = vector.broadcast %cst_81 : f32 to vector<8x128xf32>
    %263 = arith.addf %262, %261 : vector<8x128xf32>
    %264 = arith.divf %262, %263 : vector<8x128xf32>
    %265 = math.tanh %259 : vector<8x128xf32>
    %266 = vector.extract_strided_slice %264 {offsets = [0, 0], sizes = [8, 32], strides = [1, 1]} : vector<8x128xf32> to vector<8x32xf32>
    %267 = vector.extract_strided_slice %264 {offsets = [0, 32], sizes = [8, 32], strides = [1, 1]} : vector<8x128xf32> to vector<8x32xf32>
    %268 = vector.extract_strided_slice %265 {offsets = [0, 64], sizes = [8, 32], strides = [1, 1]} : vector<8x128xf32> to vector<8x32xf32>
    %269 = vector.extract_strided_slice %264 {offsets = [0, 96], sizes = [8, 32], strides = [1, 1]} : vector<8x128xf32> to vector<8x32xf32>
    %270 = arith.mulf %267, %252 : vector<8x32xf32>
    %271 = arith.mulf %266, %268 : vector<8x32xf32>
    %272 = arith.addf %270, %271 : vector<8x32xf32>
    %273 = math.tanh %272 : vector<8x32xf32>
    %274 = arith.mulf %269, %273 : vector<8x32xf32>
    %c3_i32_82 = arith.constant 3 : i32
    %c8_i32_83 = arith.constant 8 : i32
    %275 = arith.muli %c3_i32_82, %c8_i32_83 : i32
    %276 = arith.index_cast %275 : i32 to index
    %c0_84 = arith.constant 0 : index
    %277 = vector.load %arg10[%276, %c0_84] : memref<64x128xf32, #tpu.memory_space<vmem>>, vector<8x128xf32>
    %cst_85 = arith.constant dense<0.000000e+00> : vector<8x128xf32>
    %278 = tpu.matmul %274, %212, %cst_85 {dimension_numbers = #tpu.dot_dimension_numbers<[1], [0], [0], [1], [0, 0, 1, 1], [], []>} : vector<8x32xf32>, vector<32x128xf32>, vector<8x128xf32> -> vector<8x128xf32>
    %279 = arith.addf %277, %278 : vector<8x128xf32>
    %280 = arith.negf %279 : vector<8x128xf32>
    %281 = math.exp %280 : vector<8x128xf32>
    %cst_86 = arith.constant 1.000000e+00 : f32
    %282 = vector.broadcast %cst_86 : f32 to vector<8x128xf32>
    %283 = arith.addf %282, %281 : vector<8x128xf32>
    %284 = arith.divf %282, %283 : vector<8x128xf32>
    %285 = math.tanh %279 : vector<8x128xf32>
    %286 = vector.extract_strided_slice %284 {offsets = [0, 0], sizes = [8, 32], strides = [1, 1]} : vector<8x128xf32> to vector<8x32xf32>
    %287 = vector.extract_strided_slice %284 {offsets = [0, 32], sizes = [8, 32], strides = [1, 1]} : vector<8x128xf32> to vector<8x32xf32>
    %288 = vector.extract_strided_slice %285 {offsets = [0, 64], sizes = [8, 32], strides = [1, 1]} : vector<8x128xf32> to vector<8x32xf32>
    %289 = vector.extract_strided_slice %284 {offsets = [0, 96], sizes = [8, 32], strides = [1, 1]} : vector<8x128xf32> to vector<8x32xf32>
    %290 = arith.mulf %287, %272 : vector<8x32xf32>
    %291 = arith.mulf %286, %288 : vector<8x32xf32>
    %292 = arith.addf %290, %291 : vector<8x32xf32>
    %293 = math.tanh %292 : vector<8x32xf32>
    %294 = arith.mulf %289, %293 : vector<8x32xf32>
    %c4_i32_87 = arith.constant 4 : i32
    %c8_i32_88 = arith.constant 8 : i32
    %295 = arith.muli %c4_i32_87, %c8_i32_88 : i32
    %296 = arith.index_cast %295 : i32 to index
    %c0_89 = arith.constant 0 : index
    %297 = vector.load %arg10[%296, %c0_89] : memref<64x128xf32, #tpu.memory_space<vmem>>, vector<8x128xf32>
    %cst_90 = arith.constant dense<0.000000e+00> : vector<8x128xf32>
    %298 = tpu.matmul %294, %212, %cst_90 {dimension_numbers = #tpu.dot_dimension_numbers<[1], [0], [0], [1], [0, 0, 1, 1], [], []>} : vector<8x32xf32>, vector<32x128xf32>, vector<8x128xf32> -> vector<8x128xf32>
    %299 = arith.addf %297, %298 : vector<8x128xf32>
    %300 = arith.negf %299 : vector<8x128xf32>
    %301 = math.exp %300 : vector<8x128xf32>
    %cst_91 = arith.constant 1.000000e+00 : f32
    %302 = vector.broadcast %cst_91 : f32 to vector<8x128xf32>
    %303 = arith.addf %302, %301 : vector<8x128xf32>
    %304 = arith.divf %302, %303 : vector<8x128xf32>
    %305 = math.tanh %299 : vector<8x128xf32>
    %306 = vector.extract_strided_slice %304 {offsets = [0, 0], sizes = [8, 32], strides = [1, 1]} : vector<8x128xf32> to vector<8x32xf32>
    %307 = vector.extract_strided_slice %304 {offsets = [0, 32], sizes = [8, 32], strides = [1, 1]} : vector<8x128xf32> to vector<8x32xf32>
    %308 = vector.extract_strided_slice %305 {offsets = [0, 64], sizes = [8, 32], strides = [1, 1]} : vector<8x128xf32> to vector<8x32xf32>
    %309 = vector.extract_strided_slice %304 {offsets = [0, 96], sizes = [8, 32], strides = [1, 1]} : vector<8x128xf32> to vector<8x32xf32>
    %310 = arith.mulf %307, %292 : vector<8x32xf32>
    %311 = arith.mulf %306, %308 : vector<8x32xf32>
    %312 = arith.addf %310, %311 : vector<8x32xf32>
    %313 = math.tanh %312 : vector<8x32xf32>
    %314 = arith.mulf %309, %313 : vector<8x32xf32>
    %c5_i32_92 = arith.constant 5 : i32
    %c8_i32_93 = arith.constant 8 : i32
    %315 = arith.muli %c5_i32_92, %c8_i32_93 : i32
    %316 = arith.index_cast %315 : i32 to index
    %c0_94 = arith.constant 0 : index
    %317 = vector.load %arg10[%316, %c0_94] : memref<64x128xf32, #tpu.memory_space<vmem>>, vector<8x128xf32>
    %cst_95 = arith.constant dense<0.000000e+00> : vector<8x128xf32>
    %318 = tpu.matmul %314, %212, %cst_95 {dimension_numbers = #tpu.dot_dimension_numbers<[1], [0], [0], [1], [0, 0, 1, 1], [], []>} : vector<8x32xf32>, vector<32x128xf32>, vector<8x128xf32> -> vector<8x128xf32>
    %319 = arith.addf %317, %318 : vector<8x128xf32>
    %320 = arith.negf %319 : vector<8x128xf32>
    %321 = math.exp %320 : vector<8x128xf32>
    %cst_96 = arith.constant 1.000000e+00 : f32
    %322 = vector.broadcast %cst_96 : f32 to vector<8x128xf32>
    %323 = arith.addf %322, %321 : vector<8x128xf32>
    %324 = arith.divf %322, %323 : vector<8x128xf32>
    %325 = math.tanh %319 : vector<8x128xf32>
    %326 = vector.extract_strided_slice %324 {offsets = [0, 0], sizes = [8, 32], strides = [1, 1]} : vector<8x128xf32> to vector<8x32xf32>
    %327 = vector.extract_strided_slice %324 {offsets = [0, 32], sizes = [8, 32], strides = [1, 1]} : vector<8x128xf32> to vector<8x32xf32>
    %328 = vector.extract_strided_slice %325 {offsets = [0, 64], sizes = [8, 32], strides = [1, 1]} : vector<8x128xf32> to vector<8x32xf32>
    %329 = vector.extract_strided_slice %324 {offsets = [0, 96], sizes = [8, 32], strides = [1, 1]} : vector<8x128xf32> to vector<8x32xf32>
    %330 = arith.mulf %327, %312 : vector<8x32xf32>
    %331 = arith.mulf %326, %328 : vector<8x32xf32>
    %332 = arith.addf %330, %331 : vector<8x32xf32>
    %333 = math.tanh %332 : vector<8x32xf32>
    %334 = arith.mulf %329, %333 : vector<8x32xf32>
    %c6_i32_97 = arith.constant 6 : i32
    %c8_i32_98 = arith.constant 8 : i32
    %335 = arith.muli %c6_i32_97, %c8_i32_98 : i32
    %336 = arith.index_cast %335 : i32 to index
    %c0_99 = arith.constant 0 : index
    %337 = vector.load %arg10[%336, %c0_99] : memref<64x128xf32, #tpu.memory_space<vmem>>, vector<8x128xf32>
    %cst_100 = arith.constant dense<0.000000e+00> : vector<8x128xf32>
    %338 = tpu.matmul %334, %212, %cst_100 {dimension_numbers = #tpu.dot_dimension_numbers<[1], [0], [0], [1], [0, 0, 1, 1], [], []>} : vector<8x32xf32>, vector<32x128xf32>, vector<8x128xf32> -> vector<8x128xf32>
    %339 = arith.addf %337, %338 : vector<8x128xf32>
    %340 = arith.negf %339 : vector<8x128xf32>
    %341 = math.exp %340 : vector<8x128xf32>
    %cst_101 = arith.constant 1.000000e+00 : f32
    %342 = vector.broadcast %cst_101 : f32 to vector<8x128xf32>
    %343 = arith.addf %342, %341 : vector<8x128xf32>
    %344 = arith.divf %342, %343 : vector<8x128xf32>
    %345 = math.tanh %339 : vector<8x128xf32>
    %346 = vector.extract_strided_slice %344 {offsets = [0, 0], sizes = [8, 32], strides = [1, 1]} : vector<8x128xf32> to vector<8x32xf32>
    %347 = vector.extract_strided_slice %344 {offsets = [0, 32], sizes = [8, 32], strides = [1, 1]} : vector<8x128xf32> to vector<8x32xf32>
    %348 = vector.extract_strided_slice %345 {offsets = [0, 64], sizes = [8, 32], strides = [1, 1]} : vector<8x128xf32> to vector<8x32xf32>
    %349 = vector.extract_strided_slice %344 {offsets = [0, 96], sizes = [8, 32], strides = [1, 1]} : vector<8x128xf32> to vector<8x32xf32>
    %350 = arith.mulf %347, %332 : vector<8x32xf32>
    %351 = arith.mulf %346, %348 : vector<8x32xf32>
    %352 = arith.addf %350, %351 : vector<8x32xf32>
    %353 = math.tanh %352 : vector<8x32xf32>
    %354 = arith.mulf %349, %353 : vector<8x32xf32>
    %c7_i32_102 = arith.constant 7 : i32
    %c8_i32_103 = arith.constant 8 : i32
    %355 = arith.muli %c7_i32_102, %c8_i32_103 : i32
    %356 = arith.index_cast %355 : i32 to index
    %c0_104 = arith.constant 0 : index
    %357 = vector.load %arg10[%356, %c0_104] : memref<64x128xf32, #tpu.memory_space<vmem>>, vector<8x128xf32>
    %cst_105 = arith.constant dense<0.000000e+00> : vector<8x128xf32>
    %358 = tpu.matmul %354, %212, %cst_105 {dimension_numbers = #tpu.dot_dimension_numbers<[1], [0], [0], [1], [0, 0, 1, 1], [], []>} : vector<8x32xf32>, vector<32x128xf32>, vector<8x128xf32> -> vector<8x128xf32>
    %359 = arith.addf %357, %358 : vector<8x128xf32>
    %360 = arith.negf %359 : vector<8x128xf32>
    %361 = math.exp %360 : vector<8x128xf32>
    %cst_106 = arith.constant 1.000000e+00 : f32
    %362 = vector.broadcast %cst_106 : f32 to vector<8x128xf32>
    %363 = arith.addf %362, %361 : vector<8x128xf32>
    %364 = arith.divf %362, %363 : vector<8x128xf32>
    %365 = math.tanh %359 : vector<8x128xf32>
    %366 = vector.extract_strided_slice %364 {offsets = [0, 0], sizes = [8, 32], strides = [1, 1]} : vector<8x128xf32> to vector<8x32xf32>
    %367 = vector.extract_strided_slice %364 {offsets = [0, 32], sizes = [8, 32], strides = [1, 1]} : vector<8x128xf32> to vector<8x32xf32>
    %368 = vector.extract_strided_slice %365 {offsets = [0, 64], sizes = [8, 32], strides = [1, 1]} : vector<8x128xf32> to vector<8x32xf32>
    %369 = vector.extract_strided_slice %364 {offsets = [0, 96], sizes = [8, 32], strides = [1, 1]} : vector<8x128xf32> to vector<8x32xf32>
    %370 = arith.mulf %367, %352 : vector<8x32xf32>
    %371 = arith.mulf %366, %368 : vector<8x32xf32>
    %372 = arith.addf %370, %371 : vector<8x32xf32>
    %373 = math.tanh %372 : vector<8x32xf32>
    %374 = arith.mulf %369, %373 : vector<8x32xf32>
    %c8_i32_107 = arith.constant 8 : i32
    %c0_108 = arith.constant 0 : index
    %c0_109 = arith.constant 0 : index
    %375 = vector.load %arg7[%c0_108, %c0_109] : memref<32x1xf32, #tpu.memory_space<vmem>>, vector<32x1xf32>
    %cst_110 = arith.constant dense<0.000000e+00> : vector<8x1xf32>
    %376 = tpu.matmul %374, %375, %cst_110 {dimension_numbers = #tpu.dot_dimension_numbers<[1], [0], [0], [1], [0, 0, 1, 1], [], []>} : vector<8x32xf32>, vector<32x1xf32>, vector<8x1xf32> -> vector<8x1xf32>
    %c0_111 = arith.constant 0 : index
    %c0_112 = arith.constant 0 : index
    %377 = vector.load %arg8[%c0_111, %c0_112] : memref<1x1xf32, #tpu.memory_space<vmem>>, vector<1x1xf32>
    %378 = vector.broadcast %377 : vector<1x1xf32> to vector<8x1xf32>
    %379 = arith.addf %376, %378 : vector<8x1xf32>
    %380 = vector.extract_strided_slice %379 {offsets = [0, 0], sizes = [2, 1], strides = [1, 1]} : vector<8x1xf32> to vector<2x1xf32>
    %c0_113 = arith.constant 0 : index
    %c0_114 = arith.constant 0 : index
    %381 = vector.load %arg9[%c0_113, %c0_114] : memref<2x1xf32, #tpu.memory_space<vmem>>, vector<2x1xf32>
    tpu.vector_store %arg9[%c0_113, %c0_114], %380 {strides = array<i32>} : memref<2x1xf32, #tpu.memory_space<vmem>>, vector<2x1xf32>,
    return
  }
}

</mosaic_0001>

<llo_original>
// kernel: tpu_custom_call.1
$region0: #{tpu_custom_call.1}
  #allocation0 [shape = 'u32[]', space=smem, size = 0x4, offset = 0x4, fixed_abs, tag = 'smem constant byte address 0x4 - core index']
  #allocation1 [shape = 'u32[72,128]{1,0:T(1,128)}', space=vmem, size = 0x9000, scoped, tag = 'internal scratch']
  #allocation2 [shape = 'f32[64,128]{1,0:T(8,128)}', space=vmem, size = 0x8000, scoped, tag = 'scratch operand']
  #allocation3 [shape = 'f32[1,1]{1,0:T(1,128)S(1)}', space=vmem, size = 0x200, scoped, tag = 'scoped memory for tpu_custom_call.1']
  %s0 = inlined_call_operand.vmem [shape: f32[64,4], index: 0, kind: input, shape index: {}]
  %s1 = inlined_call_operand.vmem [shape: f32[4,128], index: 1, kind: input, shape index: {}]
  %s2 = inlined_call_operand.vmem [shape: f32[32,128], index: 2, kind: input, shape index: {}]
  %s3 = inlined_call_operand.vmem [shape: f32[1,128], index: 3, kind: input, shape index: {}]
  %s4 = inlined_call_operand.vmem [shape: f32[32,128], index: 4, kind: input, shape index: {}]
  %s5 = inlined_call_operand.vmem [shape: f32[32,128], index: 5, kind: input, shape index: {}]
  %s6 = inlined_call_operand.vmem [shape: f32[1,128], index: 6, kind: input, shape index: {}]
  %s7 = inlined_call_operand.vmem [shape: f32[32,1], index: 7, kind: input, shape index: {}]
  %s8 = inlined_call_operand.<no memory space> [shape: f32[1,1], index: 8, kind: input, shape index: {}]
  %s9 = inlined_call_operand.vmem [shape: f32[2,1], index: 9, kind: output, shape index: {}]
  %s10 = sld [smem:[#allocation0]]
  $region46: #{tpu_custom_call.1} parent=0
    _
  %s12 = ssub.s32 1, %s10
  %s13 = scalar_select 0, %s12, %s10
  %v14 = vstv %s8
  %15 = vst [vmem:[#allocation3] sm:$0x1] %v14
  // Predicated region
  $region2: #{tpu_custom_call.1} parent=0 // pred_check
    _
  $region3: #{tpu_custom_call.1} parent=0 // pred_check_branch
    %17 = sbr.rel (0) target = $region5
  $region4: #{tpu_custom_call.1} parent=0 // pred_region
    _
  $region5: #{tpu_custom_call.1} parent=0 // pred_fallthru
    _
  // Predicated region
  $region6: #{tpu_custom_call.1} parent=0 // pred_check
    _
  $region7: #{tpu_custom_call.1} parent=0 // pred_check_branch
    %19 = sbr.rel (0) target = $region9
  $region8: #{tpu_custom_call.1} parent=0 // pred_region
    _
  $region9: #{tpu_custom_call.1} parent=0 // pred_fallthru
    _
  // Predicated region
  $region10: #{tpu_custom_call.1} parent=0 // pred_check
    _
  $region11: #{tpu_custom_call.1} parent=0 // pred_check_branch
    %21 = sbr.rel (0) target = $region13
  $region12: #{tpu_custom_call.1} parent=0 // pred_region
    _
  $region13: #{tpu_custom_call.1} parent=0 // pred_fallthru
    _
  // Predicated region
  $region14: #{tpu_custom_call.1} parent=0 // pred_check
    _
  $region15: #{tpu_custom_call.1} parent=0 // pred_check_branch
    %23 = sbr.rel (0) target = $region17
  $region16: #{tpu_custom_call.1} parent=0 // pred_region
    _
  $region17: #{tpu_custom_call.1} parent=0 // pred_fallthru
    _
  // Predicated region
  $region18: #{tpu_custom_call.1} parent=0 // pred_check
    _
  $region19: #{tpu_custom_call.1} parent=0 // pred_check_branch
    %25 = sbr.rel (0) target = $region21
  $region20: #{tpu_custom_call.1} parent=0 // pred_region
    _
  $region21: #{tpu_custom_call.1} parent=0 // pred_fallthru
    _
  // Predicated region
  $region22: #{tpu_custom_call.1} parent=0 // pred_check
    _
  $region23: #{tpu_custom_call.1} parent=0 // pred_check_branch
    %27 = sbr.rel (0) target = $region25
  $region24: #{tpu_custom_call.1} parent=0 // pred_region
    _
  $region25: #{tpu_custom_call.1} parent=0 // pred_fallthru
    _
  // Predicated region
  $region26: #{tpu_custom_call.1} parent=0 // pred_check
    _
  $region27: #{tpu_custom_call.1} parent=0 // pred_check_branch
    %29 = sbr.rel (0) target = $region29
  $region28: #{tpu_custom_call.1} parent=0 // pred_region
    _
  $region29: #{tpu_custom_call.1} parent=0 // pred_fallthru
    _
  // Predicated region
  $region30: #{tpu_custom_call.1} parent=0 // pred_check
    _
  $region31: #{tpu_custom_call.1} parent=0 // pred_check_branch
    %31 = sbr.rel (0) target = $region33
  $region32: #{tpu_custom_call.1} parent=0 // pred_region
    _
  $region33: #{tpu_custom_call.1} parent=0 // pred_fallthru
    _
  // Predicated region
  $region34: #{tpu_custom_call.1} parent=0 // pred_check
    _
  $region35: #{tpu_custom_call.1} parent=0 // pred_check_branch
    %33 = sbr.rel (0) target = $region37
  $region36: #{tpu_custom_call.1} parent=0 // pred_region
    _
  $region37: #{tpu_custom_call.1} parent=0 // pred_fallthru
    _
  %v34 = vld [vmem:[%s1] sm:$0xf]
  %v35 = vld [vmem:[%s3] sm:$0x1]
  %v36 = vld [vmem:[%s0] sm:$0xff]
  %v37 = vld [vmem:[%s0 + $0x8] sm:$0xff]
  %v38 = vld [vmem:[%s0 + $0x10] sm:$0xff]
  %v39 = vld [vmem:[%s0 + $0x18] sm:$0xff]
  %v40 = vld [vmem:[%s0 + $0x20] sm:$0xff]
  %v41 = vld [vmem:[%s0 + $0x28] sm:$0xff]
  %v42 = vld [vmem:[%s0 + $0x30] sm:$0xff]
  %v43 = vld [vmem:[%s0 + $0x38] sm:$0xff]
  %v45 = vperm.slane %v35, 0
  %vm47 = vcmask 31744
  %v49 = vsel %vm47, %v36, 0
  %v52 = vsel %vm47, %v37, 0
  %v55 = vsel %vm47, %v38, 0
  %v58 = vsel %vm47, %v39, 0
  %v61 = vsel %vm47, %v40, 0
  %v64 = vsel %vm47, %v41, 0
  %v67 = vsel %vm47, %v42, 0
  %v70 = vsel %vm47, %v43, 0
  %vm72 = vcmask 1043456
  %v74 = vsel %vm72, %v34, 0
  %76 = vmatpush.msra.mxu0 0.0
  %77 = vmatpush.msra.mxu0 0.0
  %78 = vmatpush.msra.mxu0 0.0
  %79 = vmatpush.msra.mxu0 0.0
  %80 = vmatpush.msra.mxu0 0.0
  %81 = vmatpush.msra.mxu0 0.0
  %82 = vmatpush.msra.mxu0 0.0
  %83 = vmatpush.msra.mxu0 0.0
  %84 = vmatpush.msra.mxu0 0.0
  %85 = vmatpush.msra.mxu0 0.0
  %86 = vmatpush.msra.mxu0 0.0
  %87 = vmatpush.msra.mxu0 0.0
  %88 = vmatpush.msra.mxu0 0.0
  %89 = vmatpush.msra.mxu0 0.0
  %90 = vmatpush.msra.mxu0 0.0
  %91 = vmatpush.msra.mxu0 %v74
  %92 = vmatmul.f32.gmra.mxu0 %v49
  %v93 = vpop.f32.mrf.mxu0
  %v94 = vadd.f32 %v45, %v93
  %95 = vmatmul.f32.gmra.mxu0 %v52
  %v96 = vpop.f32.mrf.mxu0
  %v97 = vadd.f32 %v45, %v96
  %98 = vmatmul.f32.gmra.mxu0 %v55
  %v99 = vpop.f32.mrf.mxu0
  %v100 = vadd.f32 %v45, %v99
  %101 = vmatmul.f32.gmra.mxu0 %v58
  %v102 = vpop.f32.mrf.mxu0
  %v103 = vadd.f32 %v45, %v102
  %104 = vmatmul.f32.gmra.mxu0 %v61
  %v105 = vpop.f32.mrf.mxu0
  %v106 = vadd.f32 %v45, %v105
  %107 = vmatmul.f32.gmra.mxu0 %v64
  %v108 = vpop.f32.mrf.mxu0
  %v109 = vadd.f32 %v45, %v108
  %110 = vmatmul.f32.gmra.mxu0 %v67
  %v111 = vpop.f32.mrf.mxu0
  %v112 = vadd.f32 %v45, %v111
  %113 = vmatmul.f32.gmra.mxu0 %v70
  %v114 = vpop.f32.mrf.mxu0
  %v115 = vadd.f32 %v45, %v114
  %116 = vdwg.mxu0
  %117 = vst [vmem:[#allocation2] sm:$0xff] %v94
  %118 = vst [vmem:[#allocation2 + $0x8] sm:$0xff] %v97
  %119 = vst [vmem:[#allocation2 + $0x10] sm:$0xff] %v100
  %120 = vst [vmem:[#allocation2 + $0x18] sm:$0xff] %v103
  %121 = vst [vmem:[#allocation2 + $0x20] sm:$0xff] %v106
  %122 = vst [vmem:[#allocation2 + $0x28] sm:$0xff] %v109
  %123 = vst [vmem:[#allocation2 + $0x30] sm:$0xff] %v112
  %124 = vst [vmem:[#allocation2 + $0x38] sm:$0xff] %v115
  %v125 = vld [vmem:[%s2] sm:$0xff]
  %v126 = vld [vmem:[%s2 + $0x8] sm:$0xff]
  %v127 = vld [vmem:[%s2 + $0x10] sm:$0xff]
  %v128 = vld [vmem:[%s2 + $0x18] sm:$0xff]
  %v129 = vld [vmem:[%s4] sm:$0xff]
  %v130 = vld [vmem:[%s4 + $0x8] sm:$0xff]
  %v131 = vld [vmem:[%s4 + $0x10] sm:$0xff]
  %v132 = vld [vmem:[%s4 + $0x18] sm:$0xff]
  %v133 = vld [vmem:[%s6] sm:$0x1]
  %v134 = vld [vmem:[#allocation2] sm:$0xff]
  %vm135 = vcmask 261120
  %v137 = vsel %vm135, 0.0, 0
  %139 = vmatpush.msra.mxu0 0.0
  %140 = vmatpush.msra.mxu0 0.0
  %141 = vmatpush.msra.mxu0 0.0
  %142 = vmatpush.msra.mxu0 0.0
  %143 = vmatpush.msra.mxu0 0.0
  %144 = vmatpush.msra.mxu0 0.0
  %145 = vmatpush.msra.mxu0 0.0
  %146 = vmatpush.msra.mxu0 0.0
  %147 = vmatpush.msra.mxu0 0.0
  %148 = vmatpush.msra.mxu0 0.0
  %149 = vmatpush.msra.mxu0 0.0
  %150 = vmatpush.msra.mxu0 0.0
  %151 = vmatpush.msra.mxu0 %v128
  %152 = vmatpush.msra.mxu0 %v127
  %153 = vmatpush.msra.mxu0 %v126
  %154 = vmatpush.msra.mxu0 %v125
  %155 = vmatmul.f32.gmra.mxu0 %v137
  %v156 = vpop.f32.mrf.mxu0
  %v157 = vadd.f32 0.0, %v156
  %158 = vdwg.mxu0
  %v159 = vadd.f32 %v134, %v157
  %v160 = vxor.u32 %v159, 2147483648
  %v161 = vmul.f32 %v160, 1.442695
  %v162 = vpow.pop %v161
  %v163 = vadd.f32 %v162, 1.0
  %v164 = vrcp.pop %v163
  %v165 = vmul.f32 %v163, %v164
  %v166 = vsub.f32 1.0, %v165
  %v167 = vmul.f32 %v164, %v166
  %v168 = vadd.f32 %v164, %v167
  %vm169 = vweird.f32 %v163
  %vm170 = vweird.f32 %v164
  %vm171 = vmor %vm169, %vm170
  %v172 = vsel %vm171, %v164, %v168
  %v173 = vand.u32 2147483647, %v163
  %vm174 = vcmp.eq.f32.partialorder %v173, 8.507059e+37
  %v175 = vand.u32 %v163, 2147483648
  %v176 = vor.u32 1.1754944e-38, %v175
  %v177 = vsel %vm174, %v176, %v172
  %v178 = vmul.f32 1.0, %v177
  %v179 = vtanh.pop %v159
  %v180 = vmul.f32 %v178, 0.0
  %182 = vrot.lane.b32.xlu0 %v179, 64
  %v183 = vpop.permute.xlu0 %182
  %v185 = vmul.f32 %v178, %v183
  %187 = vrot.lane.b32.xlu0 %v185, 32
  %v188 = vpop.permute.xlu0 %187
  %v190 = vadd.f32 %v180, %v188
  %v191 = vtanh.pop %v190
  %193 = vrot.lane.b32.xlu0 %v191, 64
  %v194 = vpop.permute.xlu0 %193
  %v196 = vmul.f32 %v178, %v194
  %v198 = vperm.slane %v133, 0
  %201 = vrot.lane.b32.xlu0 %v196, 32
  %v202 = vpop.permute.xlu0 %201
  %v203 = vsel %vm135, %v202, 0
  %205 = vmatpush.msra.mxu0 0.0
  %206 = vmatpush.msra.mxu0 0.0
  %207 = vmatpush.msra.mxu0 0.0
  %208 = vmatpush.msra.mxu0 0.0
  %209 = vmatpush.msra.mxu0 0.0
  %210 = vmatpush.msra.mxu0 0.0
  %211 = vmatpush.msra.mxu0 0.0
  %212 = vmatpush.msra.mxu0 0.0
  %213 = vmatpush.msra.mxu0 0.0
  %214 = vmatpush.msra.mxu0 0.0
  %215 = vmatpush.msra.mxu0 0.0
  %216 = vmatpush.msra.mxu0 0.0
  %217 = vmatpush.msra.mxu0 %v132
  %218 = vmatpush.msra.mxu0 %v131
  %219 = vmatpush.msra.mxu0 %v130
  %220 = vmatpush.msra.mxu0 %v129
  %221 = vmatmul.f32.gmra.mxu0 %v203
  %v222 = vpop.f32.mrf.mxu0
  %v223 = vadd.f32 %v198, %v222
  %224 = vdwg.mxu0
  %225 = vst [vmem:[#allocation2] sm:$0xff] %v223
  %v226 = vld [vmem:[#allocation2 + $0x8] sm:$0xff]
  %227 = vmatpush.msra.mxu0 0.0
  %228 = vmatpush.msra.mxu0 0.0
  %229 = vmatpush.msra.mxu0 0.0
  %230 = vmatpush.msra.mxu0 0.0
  %231 = vmatpush.msra.mxu0 0.0
  %232 = vmatpush.msra.mxu0 0.0
  %233 = vmatpush.msra.mxu0 0.0
  %234 = vmatpush.msra.mxu0 0.0
  %235 = vmatpush.msra.mxu0 0.0
  %236 = vmatpush.msra.mxu0 0.0
  %237 = vmatpush.msra.mxu0 0.0
  %238 = vmatpush.msra.mxu0 0.0
  %239 = vmatpush.msra.mxu0 %v128
  %240 = vmatpush.msra.mxu0 %v127
  %241 = vmatpush.msra.mxu0 %v126
  %242 = vmatpush.msra.mxu0 %v125
  %243 = vmatmul.f32.gmra.mxu0 %v203
  %v244 = vpop.f32.mrf.mxu0
  %v245 = vadd.f32 0.0, %v244
  %246 = vdwg.mxu0
  %v247 = vadd.f32 %v226, %v245
  %v248 = vxor.u32 %v247, 2147483648
  %v249 = vmul.f32 %v248, 1.442695
  %v250 = vpow.pop %v249
  %v251 = vadd.f32 %v250, 1.0
  %v252 = vrcp.pop %v251
  %v253 = vmul.f32 %v251, %v252
  %v254 = vsub.f32 1.0, %v253
  %v255 = vmul.f32 %v252, %v254
  %v256 = vadd.f32 %v252, %v255
  %vm257 = vweird.f32 %v251
  %vm258 = vweird.f32 %v252
  %vm259 = vmor %vm257, %vm258
  %v260 = vsel %vm259, %v252, %v256
  %v261 = vand.u32 2147483647, %v251
  %vm262 = vcmp.eq.f32.partialorder %v261, 8.507059e+37
  %v263 = vand.u32 %v251, 2147483648
  %v264 = vor.u32 1.1754944e-38, %v263
  %v265 = vsel %vm262, %v264, %v260
  %v266 = vmul.f32 1.0, %v265
  %v267 = vtanh.pop %v247
  %v268 = vmul.f32 %v266, %v190
  %270 = vrot.lane.b32.xlu0 %v267, 64
  %v271 = vpop.permute.xlu0 %270
  %v273 = vmul.f32 %v266, %v271
  %275 = vrot.lane.b32.xlu0 %v273, 32
  %v276 = vpop.permute.xlu0 %275
  %v278 = vadd.f32 %v268, %v276
  %v279 = vtanh.pop %v278
  %281 = vrot.lane.b32.xlu0 %v279, 64
  %v282 = vpop.permute.xlu0 %281
  %v284 = vmul.f32 %v266, %v282
  %286 = vrot.lane.b32.xlu0 %v284, 32
  %v287 = vpop.permute.xlu0 %286
  %v288 = vsel %vm135, %v287, 0
  %290 = vmatpush.msra.mxu0 0.0
  %291 = vmatpush.msra.mxu0 0.0
  %292 = vmatpush.msra.mxu0 0.0
  %293 = vmatpush.msra.mxu0 0.0
  %294 = vmatpush.msra.mxu0 0.0
  %295 = vmatpush.msra.mxu0 0.0
  %296 = vmatpush.msra.mxu0 0.0
  %297 = vmatpush.msra.mxu0 0.0
  %298 = vmatpush.msra.mxu0 0.0
  %299 = vmatpush.msra.mxu0 0.0
  %300 = vmatpush.msra.mxu0 0.0
  %301 = vmatpush.msra.mxu0 0.0
  %302 = vmatpush.msra.mxu0 %v132
  %303 = vmatpush.msra.mxu0 %v131
  %304 = vmatpush.msra.mxu0 %v130
  %305 = vmatpush.msra.mxu0 %v129
  %306 = vmatmul.f32.gmra.mxu0 %v288
  %v307 = vpop.f32.mrf.mxu0
  %v308 = vadd.f32 %v198, %v307
  %309 = vdwg.mxu0
  %310 = vst [vmem:[#allocation2 + $0x8] sm:$0xff] %v308
  %v311 = vld [vmem:[#allocation2 + $0x10] sm:$0xff]
  %312 = vmatpush.msra.mxu0 0.0
  %313 = vmatpush.msra.mxu0 0.0
  %314 = vmatpush.msra.mxu0 0.0
  %315 = vmatpush.msra.mxu0 0.0
  %316 = vmatpush.msra.mxu0 0.0
  %317 = vmatpush.msra.mxu0 0.0
  %318 = vmatpush.msra.mxu0 0.0
  %319 = vmatpush.msra.mxu0 0.0
  %320 = vmatpush.msra.mxu0 0.0
  %321 = vmatpush.msra.mxu0 0.0
  %322 = vmatpush.msra.mxu0 0.0
  %323 = vmatpush.msra.mxu0 0.0
  %324 = vmatpush.msra.mxu0 %v128
  %325 = vmatpush.msra.mxu0 %v127
  %326 = vmatpush.msra.mxu0 %v126
  %327 = vmatpush.msra.mxu0 %v125
  %328 = vmatmul.f32.gmra.mxu0 %v288
  %v329 = vpop.f32.mrf.mxu0
  %v330 = vadd.f32 0.0, %v329
  %331 = vdwg.mxu0
  %v332 = vadd.f32 %v311, %v330
  %v333 = vxor.u32 %v332, 2147483648
  %v334 = vmul.f32 %v333, 1.442695
  %v335 = vpow.pop %v334
  %v336 = vadd.f32 %v335, 1.0
  %v337 = vrcp.pop %v336
  %v338 = vmul.f32 %v336, %v337
  %v339 = vsub.f32 1.0, %v338
  %v340 = vmul.f32 %v337, %v339
  %v341 = vadd.f32 %v337, %v340
  %vm342 = vweird.f32 %v336
  %vm343 = vweird.f32 %v337
  %vm344 = vmor %vm342, %vm343
  %v345 = vsel %vm344, %v337, %v341
  %v346 = vand.u32 2147483647, %v336
  %vm347 = vcmp.eq.f32.partialorder %v346, 8.507059e+37
  %v348 = vand.u32 %v336, 2147483648
  %v349 = vor.u32 1.1754944e-38, %v348
  %v350 = vsel %vm347, %v349, %v345
  %v351 = vmul.f32 1.0, %v350
  %v352 = vtanh.pop %v332
  %v353 = vmul.f32 %v351, %v278
  %355 = vrot.lane.b32.xlu0 %v352, 64
  %v356 = vpop.permute.xlu0 %355
  %v358 = vmul.f32 %v351, %v356
  %360 = vrot.lane.b32.xlu0 %v358, 32
  %v361 = vpop.permute.xlu0 %360
  %v363 = vadd.f32 %v353, %v361
  %v364 = vtanh.pop %v363
  %366 = vrot.lane.b32.xlu0 %v364, 64
  %v367 = vpop.permute.xlu0 %366
  %v369 = vmul.f32 %v351, %v367
  %371 = vrot.lane.b32.xlu0 %v369, 32
  %v372 = vpop.permute.xlu0 %371
  %v373 = vsel %vm135, %v372, 0
  %375 = vmatpush.msra.mxu0 0.0
  %376 = vmatpush.msra.mxu0 0.0
  %377 = vmatpush.msra.mxu0 0.0
  %378 = vmatpush.msra.mxu0 0.0
  %379 = vmatpush.msra.mxu0 0.0
  %380 = vmatpush.msra.mxu0 0.0
  %381 = vmatpush.msra.mxu0 0.0
  %382 = vmatpush.msra.mxu0 0.0
  %383 = vmatpush.msra.mxu0 0.0
  %384 = vmatpush.msra.mxu0 0.0
  %385 = vmatpush.msra.mxu0 0.0
  %386 = vmatpush.msra.mxu0 0.0
  %387 = vmatpush.msra.mxu0 %v132
  %388 = vmatpush.msra.mxu0 %v131
  %389 = vmatpush.msra.mxu0 %v130
  %390 = vmatpush.msra.mxu0 %v129
  %391 = vmatmul.f32.gmra.mxu0 %v373
  %v392 = vpop.f32.mrf.mxu0
  %v393 = vadd.f32 %v198, %v392
  %394 = vdwg.mxu0
  %395 = vst [vmem:[#allocation2 + $0x10] sm:$0xff] %v393
  %v396 = vld [vmem:[#allocation2 + $0x18] sm:$0xff]
  %397 = vmatpush.msra.mxu0 0.0
  %398 = vmatpush.msra.mxu0 0.0
  %399 = vmatpush.msra.mxu0 0.0
  %400 = vmatpush.msra.mxu0 0.0
  %401 = vmatpush.msra.mxu0 0.0
  %402 = vmatpush.msra.mxu0 0.0
  %403 = vmatpush.msra.mxu0 0.0
  %404 = vmatpush.msra.mxu0 0.0
  %405 = vmatpush.msra.mxu0 0.0
  %406 = vmatpush.msra.mxu0 0.0
  %407 = vmatpush.msra.mxu0 0.0
  %408 = vmatpush.msra.mxu0 0.0
  %409 = vmatpush.msra.mxu0 %v128
  %410 = vmatpush.msra.mxu0 %v127
  %411 = vmatpush.msra.mxu0 %v126
  %412 = vmatpush.msra.mxu0 %v125
  %413 = vmatmul.f32.gmra.mxu0 %v373
  %v414 = vpop.f32.mrf.mxu0
  %v415 = vadd.f32 0.0, %v414
  %416 = vdwg.mxu0
  %v417 = vadd.f32 %v396, %v415
  %v418 = vxor.u32 %v417, 2147483648
  %v419 = vmul.f32 %v418, 1.442695
  %v420 = vpow.pop %v419
  %v421 = vadd.f32 %v420, 1.0
  %v422 = vrcp.pop %v421
  %v423 = vmul.f32 %v421, %v422
  %v424 = vsub.f32 1.0, %v423
  %v425 = vmul.f32 %v422, %v424
  %v426 = vadd.f32 %v422, %v425
  %vm427 = vweird.f32 %v421
  %vm428 = vweird.f32 %v422
  %vm429 = vmor %vm427, %vm428
  %v430 = vsel %vm429, %v422, %v426
  %v431 = vand.u32 2147483647, %v421
  %vm432 = vcmp.eq.f32.partialorder %v431, 8.507059e+37
  %v433 = vand.u32 %v421, 2147483648
  %v434 = vor.u32 1.1754944e-38, %v433
  %v435 = vsel %vm432, %v434, %v430
  %v436 = vmul.f32 1.0, %v435
  %v437 = vtanh.pop %v417
  %v438 = vmul.f32 %v436, %v363
  %440 = vrot.lane.b32.xlu0 %v437, 64
  %v441 = vpop.permute.xlu0 %440
  %v443 = vmul.f32 %v436, %v441
  %445 = vrot.lane.b32.xlu0 %v443, 32
  %v446 = vpop.permute.xlu0 %445
  %v448 = vadd.f32 %v438, %v446
  %v449 = vtanh.pop %v448
  %451 = vrot.lane.b32.xlu0 %v449, 64
  %v452 = vpop.permute.xlu0 %451
  %v454 = vmul.f32 %v436, %v452
  %456 = vrot.lane.b32.xlu0 %v454, 32
  %v457 = vpop.permute.xlu0 %456
  %v458 = vsel %vm135, %v457, 0
  %460 = vmatpush.msra.mxu0 0.0
  %461 = vmatpush.msra.mxu0 0.0
  %462 = vmatpush.msra.mxu0 0.0
  %463 = vmatpush.msra.mxu0 0.0
  %464 = vmatpush.msra.mxu0 0.0
  %465 = vmatpush.msra.mxu0 0.0
  %466 = vmatpush.msra.mxu0 0.0
  %467 = vmatpush.msra.mxu0 0.0
  %468 = vmatpush.msra.mxu0 0.0
  %469 = vmatpush.msra.mxu0 0.0
  %470 = vmatpush.msra.mxu0 0.0
  %471 = vmatpush.msra.mxu0 0.0
  %472 = vmatpush.msra.mxu0 %v132
  %473 = vmatpush.msra.mxu0 %v131
  %474 = vmatpush.msra.mxu0 %v130
  %475 = vmatpush.msra.mxu0 %v129
  %476 = vmatmul.f32.gmra.mxu0 %v458
  %v477 = vpop.f32.mrf.mxu0
  %v478 = vadd.f32 %v198, %v477
  %479 = vdwg.mxu0
  %480 = vst [vmem:[#allocation2 + $0x18] sm:$0xff] %v478
  %v481 = vld [vmem:[#allocation2 + $0x20] sm:$0xff]
  %482 = vmatpush.msra.mxu0 0.0
  %483 = vmatpush.msra.mxu0 0.0
  %484 = vmatpush.msra.mxu0 0.0
  %485 = vmatpush.msra.mxu0 0.0
  %486 = vmatpush.msra.mxu0 0.0
  %487 = vmatpush.msra.mxu0 0.0
  %488 = vmatpush.msra.mxu0 0.0
  %489 = vmatpush.msra.mxu0 0.0
  %490 = vmatpush.msra.mxu0 0.0
  %491 = vmatpush.msra.mxu0 0.0
  %492 = vmatpush.msra.mxu0 0.0
  %493 = vmatpush.msra.mxu0 0.0
  %494 = vmatpush.msra.mxu0 %v128
  %495 = vmatpush.msra.mxu0 %v127
  %496 = vmatpush.msra.mxu0 %v126
  %497 = vmatpush.msra.mxu0 %v125
  %498 = vmatmul.f32.gmra.mxu0 %v458
  %v499 = vpop.f32.mrf.mxu0
  %v500 = vadd.f32 0.0, %v499
  %501 = vdwg.mxu0
  %v502 = vadd.f32 %v481, %v500
  %v503 = vxor.u32 %v502, 2147483648
  %v504 = vmul.f32 %v503, 1.442695
  %v505 = vpow.pop %v504
  %v506 = vadd.f32 %v505, 1.0
  %v507 = vrcp.pop %v506
  %v508 = vmul.f32 %v506, %v507
  %v509 = vsub.f32 1.0, %v508
  %v510 = vmul.f32 %v507, %v509
  %v511 = vadd.f32 %v507, %v510
  %vm512 = vweird.f32 %v506
  %vm513 = vweird.f32 %v507
  %vm514 = vmor %vm512, %vm513
  %v515 = vsel %vm514, %v507, %v511
  %v516 = vand.u32 2147483647, %v506
  %vm517 = vcmp.eq.f32.partialorder %v516, 8.507059e+37
  %v518 = vand.u32 %v506, 2147483648
  %v519 = vor.u32 1.1754944e-38, %v518
  %v520 = vsel %vm517, %v519, %v515
  %v521 = vmul.f32 1.0, %v520
  %v522 = vtanh.pop %v502
  %v523 = vmul.f32 %v521, %v448
  %525 = vrot.lane.b32.xlu0 %v522, 64
  %v526 = vpop.permute.xlu0 %525
  %v528 = vmul.f32 %v521, %v526
  %530 = vrot.lane.b32.xlu0 %v528, 32
  %v531 = vpop.permute.xlu0 %530
  %v533 = vadd.f32 %v523, %v531
  %v534 = vtanh.pop %v533
  %536 = vrot.lane.b32.xlu0 %v534, 64
  %v537 = vpop.permute.xlu0 %536
  %v539 = vmul.f32 %v521, %v537
  %541 = vrot.lane.b32.xlu0 %v539, 32
  %v542 = vpop.permute.xlu0 %541
  %v543 = vsel %vm135, %v542, 0
  %545 = vmatpush.msra.mxu0 0.0
  %546 = vmatpush.msra.mxu0 0.0
  %547 = vmatpush.msra.mxu0 0.0
  %548 = vmatpush.msra.mxu0 0.0
  %549 = vmatpush.msra.mxu0 0.0
  %550 = vmatpush.msra.mxu0 0.0
  %551 = vmatpush.msra.mxu0 0.0
  %552 = vmatpush.msra.mxu0 0.0
  %553 = vmatpush.msra.mxu0 0.0
  %554 = vmatpush.msra.mxu0 0.0
  %555 = vmatpush.msra.mxu0 0.0
  %556 = vmatpush.msra.mxu0 0.0
  %557 = vmatpush.msra.mxu0 %v132
  %558 = vmatpush.msra.mxu0 %v131
  %559 = vmatpush.msra.mxu0 %v130
  %560 = vmatpush.msra.mxu0 %v129
  %561 = vmatmul.f32.gmra.mxu0 %v543
  %v562 = vpop.f32.mrf.mxu0
  %v563 = vadd.f32 %v198, %v562
  %564 = vdwg.mxu0
  %565 = vst [vmem:[#allocation2 + $0x20] sm:$0xff] %v563
  %v566 = vld [vmem:[#allocation2 + $0x28] sm:$0xff]
  %567 = vmatpush.msra.mxu0 0.0
  %568 = vmatpush.msra.mxu0 0.0
  %569 = vmatpush.msra.mxu0 0.0
  %570 = vmatpush.msra.mxu0 0.0
  %571 = vmatpush.msra.mxu0 0.0
  %572 = vmatpush.msra.mxu0 0.0
  %573 = vmatpush.msra.mxu0 0.0
  %574 = vmatpush.msra.mxu0 0.0
  %575 = vmatpush.msra.mxu0 0.0
  %576 = vmatpush.msra.mxu0 0.0
  %577 = vmatpush.msra.mxu0 0.0
  %578 = vmatpush.msra.mxu0 0.0
  %579 = vmatpush.msra.mxu0 %v128
  %580 = vmatpush.msra.mxu0 %v127
  %581 = vmatpush.msra.mxu0 %v126
  %582 = vmatpush.msra.mxu0 %v125
  %583 = vmatmul.f32.gmra.mxu0 %v543
  %v584 = vpop.f32.mrf.mxu0
  %v585 = vadd.f32 0.0, %v584
  %586 = vdwg.mxu0
  %v587 = vadd.f32 %v566, %v585
  %v588 = vxor.u32 %v587, 2147483648
  %v589 = vmul.f32 %v588, 1.442695
  %v590 = vpow.pop %v589
  %v591 = vadd.f32 %v590, 1.0
  %v592 = vrcp.pop %v591
  %v593 = vmul.f32 %v591, %v592
  %v594 = vsub.f32 1.0, %v593
  %v595 = vmul.f32 %v592, %v594
  %v596 = vadd.f32 %v592, %v595
  %vm597 = vweird.f32 %v591
  %vm598 = vweird.f32 %v592
  %vm599 = vmor %vm597, %vm598
  %v600 = vsel %vm599, %v592, %v596
  %v601 = vand.u32 2147483647, %v591
  %vm602 = vcmp.eq.f32.partialorder %v601, 8.507059e+37
  %v603 = vand.u32 %v591, 2147483648
  %v604 = vor.u32 1.1754944e-38, %v603
  %v605 = vsel %vm602, %v604, %v600
  %v606 = vmul.f32 1.0, %v605
  %v607 = vtanh.pop %v587
  %v608 = vmul.f32 %v606, %v533
  %610 = vrot.lane.b32.xlu0 %v607, 64
  %v611 = vpop.permute.xlu0 %610
  %v613 = vmul.f32 %v606, %v611
  %615 = vrot.lane.b32.xlu0 %v613, 32
  %v616 = vpop.permute.xlu0 %615
  %v618 = vadd.f32 %v608, %v616
  %v619 = vtanh.pop %v618
  %621 = vrot.lane.b32.xlu0 %v619, 64
  %v622 = vpop.permute.xlu0 %621
  %v624 = vmul.f32 %v606, %v622
  %626 = vrot.lane.b32.xlu0 %v624, 32
  %v627 = vpop.permute.xlu0 %626
  %v628 = vsel %vm135, %v627, 0
  %630 = vmatpush.msra.mxu0 0.0
  %631 = vmatpush.msra.mxu0 0.0
  %632 = vmatpush.msra.mxu0 0.0
  %633 = vmatpush.msra.mxu0 0.0
  %634 = vmatpush.msra.mxu0 0.0
  %635 = vmatpush.msra.mxu0 0.0
  %636 = vmatpush.msra.mxu0 0.0
  %637 = vmatpush.msra.mxu0 0.0
  %638 = vmatpush.msra.mxu0 0.0
  %639 = vmatpush.msra.mxu0 0.0
  %640 = vmatpush.msra.mxu0 0.0
  %641 = vmatpush.msra.mxu0 0.0
  %642 = vmatpush.msra.mxu0 %v132
  %643 = vmatpush.msra.mxu0 %v131
  %644 = vmatpush.msra.mxu0 %v130
  %645 = vmatpush.msra.mxu0 %v129
  %646 = vmatmul.f32.gmra.mxu0 %v628
  %v647 = vpop.f32.mrf.mxu0
  %v648 = vadd.f32 %v198, %v647
  %649 = vdwg.mxu0
  %650 = vst [vmem:[#allocation2 + $0x28] sm:$0xff] %v648
  %v651 = vld [vmem:[#allocation2 + $0x30] sm:$0xff]
  %652 = vmatpush.msra.mxu0 0.0
  %653 = vmatpush.msra.mxu0 0.0
  %654 = vmatpush.msra.mxu0 0.0
  %655 = vmatpush.msra.mxu0 0.0
  %656 = vmatpush.msra.mxu0 0.0
  %657 = vmatpush.msra.mxu0 0.0
  %658 = vmatpush.msra.mxu0 0.0
  %659 = vmatpush.msra.mxu0 0.0
  %660 = vmatpush.msra.mxu0 0.0
  %661 = vmatpush.msra.mxu0 0.0
  %662 = vmatpush.msra.mxu0 0.0
  %663 = vmatpush.msra.mxu0 0.0
  %664 = vmatpush.msra.mxu0 %v128
  %665 = vmatpush.msra.mxu0 %v127
  %666 = vmatpush.msra.mxu0 %v126
  %667 = vmatpush.msra.mxu0 %v125
  %668 = vmatmul.f32.gmra.mxu0 %v628
  %v669 = vpop.f32.mrf.mxu0
  %v670 = vadd.f32 0.0, %v669
  %671 = vdwg.mxu0
  %v672 = vadd.f32 %v651, %v670
  %v673 = vxor.u32 %v672, 2147483648
  %v674 = vmul.f32 %v673, 1.442695
  %v675 = vpow.pop %v674
  %v676 = vadd.f32 %v675, 1.0
  %v677 = vrcp.pop %v676
  %v678 = vmul.f32 %v676, %v677
  %v679 = vsub.f32 1.0, %v678
  %v680 = vmul.f32 %v677, %v679
  %v681 = vadd.f32 %v677, %v680
  %vm682 = vweird.f32 %v676
  %vm683 = vweird.f32 %v677
  %vm684 = vmor %vm682, %vm683
  %v685 = vsel %vm684, %v677, %v681
  %v686 = vand.u32 2147483647, %v676
  %vm687 = vcmp.eq.f32.partialorder %v686, 8.507059e+37
  %v688 = vand.u32 %v676, 2147483648
  %v689 = vor.u32 1.1754944e-38, %v688
  %v690 = vsel %vm687, %v689, %v685
  %v691 = vmul.f32 1.0, %v690
  %v692 = vtanh.pop %v672
  %v693 = vmul.f32 %v691, %v618
  %695 = vrot.lane.b32.xlu0 %v692, 64
  %v696 = vpop.permute.xlu0 %695
  %v698 = vmul.f32 %v691, %v696
  %700 = vrot.lane.b32.xlu0 %v698, 32
  %v701 = vpop.permute.xlu0 %700
  %v703 = vadd.f32 %v693, %v701
  %v704 = vtanh.pop %v703
  %706 = vrot.lane.b32.xlu0 %v704, 64
  %v707 = vpop.permute.xlu0 %706
  %v709 = vmul.f32 %v691, %v707
  %711 = vrot.lane.b32.xlu0 %v709, 32
  %v712 = vpop.permute.xlu0 %711
  %v713 = vsel %vm135, %v712, 0
  %715 = vmatpush.msra.mxu0 0.0
  %716 = vmatpush.msra.mxu0 0.0
  %717 = vmatpush.msra.mxu0 0.0
  %718 = vmatpush.msra.mxu0 0.0
  %719 = vmatpush.msra.mxu0 0.0
  %720 = vmatpush.msra.mxu0 0.0
  %721 = vmatpush.msra.mxu0 0.0
  %722 = vmatpush.msra.mxu0 0.0
  %723 = vmatpush.msra.mxu0 0.0
  %724 = vmatpush.msra.mxu0 0.0
  %725 = vmatpush.msra.mxu0 0.0
  %726 = vmatpush.msra.mxu0 0.0
  %727 = vmatpush.msra.mxu0 %v132
  %728 = vmatpush.msra.mxu0 %v131
  %729 = vmatpush.msra.mxu0 %v130
  %730 = vmatpush.msra.mxu0 %v129
  %731 = vmatmul.f32.gmra.mxu0 %v713
  %v732 = vpop.f32.mrf.mxu0
  %v733 = vadd.f32 %v198, %v732
  %734 = vdwg.mxu0
  %735 = vst [vmem:[#allocation2 + $0x30] sm:$0xff] %v733
  %v736 = vld [vmem:[#allocation2 + $0x38] sm:$0xff]
  %737 = vmatpush.msra.mxu0 0.0
  %738 = vmatpush.msra.mxu0 0.0
  %739 = vmatpush.msra.mxu0 0.0
  %740 = vmatpush.msra.mxu0 0.0
  %741 = vmatpush.msra.mxu0 0.0
  %742 = vmatpush.msra.mxu0 0.0
  %743 = vmatpush.msra.mxu0 0.0
  %744 = vmatpush.msra.mxu0 0.0
  %745 = vmatpush.msra.mxu0 0.0
  %746 = vmatpush.msra.mxu0 0.0
  %747 = vmatpush.msra.mxu0 0.0
  %748 = vmatpush.msra.mxu0 0.0
  %749 = vmatpush.msra.mxu0 %v128
  %750 = vmatpush.msra.mxu0 %v127
  %751 = vmatpush.msra.mxu0 %v126
  %752 = vmatpush.msra.mxu0 %v125
  %753 = vmatmul.f32.gmra.mxu0 %v713
  %v754 = vpop.f32.mrf.mxu0
  %v755 = vadd.f32 0.0, %v754
  %756 = vdwg.mxu0
  %v757 = vadd.f32 %v736, %v755
  %v758 = vxor.u32 %v757, 2147483648
  %v759 = vmul.f32 %v758, 1.442695
  %v760 = vpow.pop %v759
  %v761 = vadd.f32 %v760, 1.0
  %v762 = vrcp.pop %v761
  %v763 = vmul.f32 %v761, %v762
  %v764 = vsub.f32 1.0, %v763
  %v765 = vmul.f32 %v762, %v764
  %v766 = vadd.f32 %v762, %v765
  %vm767 = vweird.f32 %v761
  %vm768 = vweird.f32 %v762
  %vm769 = vmor %vm767, %vm768
  %v770 = vsel %vm769, %v762, %v766
  %v771 = vand.u32 2147483647, %v761
  %vm772 = vcmp.eq.f32.partialorder %v771, 8.507059e+37
  %v773 = vand.u32 %v761, 2147483648
  %v774 = vor.u32 1.1754944e-38, %v773
  %v775 = vsel %vm772, %v774, %v770
  %v776 = vmul.f32 1.0, %v775
  %v777 = vtanh.pop %v757
  %v778 = vmul.f32 %v776, %v703
  %780 = vrot.lane.b32.xlu0 %v777, 64
  %v781 = vpop.permute.xlu0 %780
  %v783 = vmul.f32 %v776, %v781
  %785 = vrot.lane.b32.xlu0 %v783, 32
  %v786 = vpop.permute.xlu0 %785
  %v788 = vadd.f32 %v778, %v786
  %v789 = vtanh.pop %v788
  %791 = vrot.lane.b32.xlu0 %v789, 64
  %v792 = vpop.permute.xlu0 %791
  %v794 = vmul.f32 %v776, %v792
  %796 = vrot.lane.b32.xlu0 %v794, 32
  %v797 = vpop.permute.xlu0 %796
  %v798 = vsel %vm135, %v797, 0
  %800 = vmatpush.msra.mxu0 0.0
  %801 = vmatpush.msra.mxu0 0.0
  %802 = vmatpush.msra.mxu0 0.0
  %803 = vmatpush.msra.mxu0 0.0
  %804 = vmatpush.msra.mxu0 0.0
  %805 = vmatpush.msra.mxu0 0.0
  %806 = vmatpush.msra.mxu0 0.0
  %807 = vmatpush.msra.mxu0 0.0
  %808 = vmatpush.msra.mxu0 0.0
  %809 = vmatpush.msra.mxu0 0.0
  %810 = vmatpush.msra.mxu0 0.0
  %811 = vmatpush.msra.mxu0 0.0
  %812 = vmatpush.msra.mxu0 %v132
  %813 = vmatpush.msra.mxu0 %v131
  %814 = vmatpush.msra.mxu0 %v130
  %815 = vmatpush.msra.mxu0 %v129
  %816 = vmatmul.f32.gmra.mxu0 %v798
  %v817 = vpop.f32.mrf.mxu0
  %v818 = vadd.f32 %v198, %v817
  %819 = vdwg.mxu0
  %820 = vst [vmem:[#allocation2 + $0x38] sm:$0xff] %v818
  %v821 = vld [vmem:[%s5] sm:$0xff]
  %v822 = vld [vmem:[%s5 + $0x8] sm:$0xff]
  %v823 = vld [vmem:[%s5 + $0x10] sm:$0xff]
  %v824 = vld [vmem:[%s5 + $0x18] sm:$0xff]
  %v825 = vld [vmem:[#allocation2] sm:$0xff]
  %826 = vmatpush.msra.mxu0 0.0
  %827 = vmatpush.msra.mxu0 0.0
  %828 = vmatpush.msra.mxu0 0.0
  %829 = vmatpush.msra.mxu0 0.0
  %830 = vmatpush.msra.mxu0 0.0
  %831 = vmatpush.msra.mxu0 0.0
  %832 = vmatpush.msra.mxu0 0.0
  %833 = vmatpush.msra.mxu0 0.0
  %834 = vmatpush.msra.mxu0 0.0
  %835 = vmatpush.msra.mxu0 0.0
  %836 = vmatpush.msra.mxu0 0.0
  %837 = vmatpush.msra.mxu0 0.0
  %838 = vmatpush.msra.mxu0 %v824
  %839 = vmatpush.msra.mxu0 %v823
  %840 = vmatpush.msra.mxu0 %v822
  %841 = vmatpush.msra.mxu0 %v821
  %842 = vmatmul.f32.gmra.mxu0 %v137
  %v843 = vpop.f32.mrf.mxu0
  %v844 = vadd.f32 0.0, %v843
  %845 = vdwg.mxu0
  %v846 = vadd.f32 %v825, %v844
  %v847 = vxor.u32 %v846, 2147483648
  %v848 = vmul.f32 %v847, 1.442695
  %v849 = vpow.pop %v848
  %v850 = vadd.f32 %v849, 1.0
  %v851 = vrcp.pop %v850
  %v852 = vmul.f32 %v850, %v851
  %v853 = vsub.f32 1.0, %v852
  %v854 = vmul.f32 %v851, %v853
  %v855 = vadd.f32 %v851, %v854
  %vm856 = vweird.f32 %v850
  %vm857 = vweird.f32 %v851
  %vm858 = vmor %vm856, %vm857
  %v859 = vsel %vm858, %v851, %v855
  %v860 = vand.u32 2147483647, %v850
  %vm861 = vcmp.eq.f32.partialorder %v860, 8.507059e+37
  %v862 = vand.u32 %v850, 2147483648
  %v863 = vor.u32 1.1754944e-38, %v862
  %v864 = vsel %vm861, %v863, %v859
  %v865 = vmul.f32 1.0, %v864
  %v866 = vtanh.pop %v846
  %v867 = vmul.f32 %v865, 0.0
  %869 = vrot.lane.b32.xlu0 %v866, 64
  %v870 = vpop.permute.xlu0 %869
  %v872 = vmul.f32 %v865, %v870
  %874 = vrot.lane.b32.xlu0 %v872, 32
  %v875 = vpop.permute.xlu0 %874
  %v877 = vadd.f32 %v867, %v875
  %v878 = vtanh.pop %v877
  %880 = vrot.lane.b32.xlu0 %v878, 64
  %v881 = vpop.permute.xlu0 %880
  %v883 = vmul.f32 %v865, %v881
  %v884 = vld [vmem:[#allocation2 + $0x8] sm:$0xff]
  %886 = vrot.lane.b32.xlu0 %v883, 32
  %v887 = vpop.permute.xlu0 %886
  %v888 = vsel %vm135, %v887, 0
  %890 = vmatpush.msra.mxu0 0.0
  %891 = vmatpush.msra.mxu0 0.0
  %892 = vmatpush.msra.mxu0 0.0
  %893 = vmatpush.msra.mxu0 0.0
  %894 = vmatpush.msra.mxu0 0.0
  %895 = vmatpush.msra.mxu0 0.0
  %896 = vmatpush.msra.mxu0 0.0
  %897 = vmatpush.msra.mxu0 0.0
  %898 = vmatpush.msra.mxu0 0.0
  %899 = vmatpush.msra.mxu0 0.0
  %900 = vmatpush.msra.mxu0 0.0
  %901 = vmatpush.msra.mxu0 0.0
  %902 = vmatpush.msra.mxu0 %v824
  %903 = vmatpush.msra.mxu0 %v823
  %904 = vmatpush.msra.mxu0 %v822
  %905 = vmatpush.msra.mxu0 %v821
  %906 = vmatmul.f32.gmra.mxu0 %v888
  %v907 = vpop.f32.mrf.mxu0
  %v908 = vadd.f32 0.0, %v907
  %909 = vdwg.mxu0
  %v910 = vadd.f32 %v884, %v908
  %v911 = vxor.u32 %v910, 2147483648
  %v912 = vmul.f32 %v911, 1.442695
  %v913 = vpow.pop %v912
  %v914 = vadd.f32 %v913, 1.0
  %v915 = vrcp.pop %v914
  %v916 = vmul.f32 %v914, %v915
  %v917 = vsub.f32 1.0, %v916
  %v918 = vmul.f32 %v915, %v917
  %v919 = vadd.f32 %v915, %v918
  %vm920 = vweird.f32 %v914
  %vm921 = vweird.f32 %v915
  %vm922 = vmor %vm920, %vm921
  %v923 = vsel %vm922, %v915, %v919
  %v924 = vand.u32 2147483647, %v914
  %vm925 = vcmp.eq.f32.partialorder %v924, 8.507059e+37
  %v926 = vand.u32 %v914, 2147483648
  %v927 = vor.u32 1.1754944e-38, %v926
  %v928 = vsel %vm925, %v927, %v923
  %v929 = vmul.f32 1.0, %v928
  %v930 = vtanh.pop %v910
  %v931 = vmul.f32 %v929, %v877
  %933 = vrot.lane.b32.xlu0 %v930, 64
  %v934 = vpop.permute.xlu0 %933
  %v936 = vmul.f32 %v929, %v934
  %938 = vrot.lane.b32.xlu0 %v936, 32
  %v939 = vpop.permute.xlu0 %938
  %v941 = vadd.f32 %v931, %v939
  %v942 = vtanh.pop %v941
  %944 = vrot.lane.b32.xlu0 %v942, 64
  %v945 = vpop.permute.xlu0 %944
  %v947 = vmul.f32 %v929, %v945
  %v948 = vld [vmem:[#allocation2 + $0x10] sm:$0xff]
  %950 = vrot.lane.b32.xlu0 %v947, 32
  %v951 = vpop.permute.xlu0 %950
  %v952 = vsel %vm135, %v951, 0
  %954 = vmatpush.msra.mxu0 0.0
  %955 = vmatpush.msra.mxu0 0.0
  %956 = vmatpush.msra.mxu0 0.0
  %957 = vmatpush.msra.mxu0 0.0
  %958 = vmatpush.msra.mxu0 0.0
  %959 = vmatpush.msra.mxu0 0.0
  %960 = vmatpush.msra.mxu0 0.0
  %961 = vmatpush.msra.mxu0 0.0
  %962 = vmatpush.msra.mxu0 0.0
  %963 = vmatpush.msra.mxu0 0.0
  %964 = vmatpush.msra.mxu0 0.0
  %965 = vmatpush.msra.mxu0 0.0
  %966 = vmatpush.msra.mxu0 %v824
  %967 = vmatpush.msra.mxu0 %v823
  %968 = vmatpush.msra.mxu0 %v822
  %969 = vmatpush.msra.mxu0 %v821
  %970 = vmatmul.f32.gmra.mxu0 %v952
  %v971 = vpop.f32.mrf.mxu0
  %v972 = vadd.f32 0.0, %v971
  %973 = vdwg.mxu0
  %v974 = vadd.f32 %v948, %v972
  %v975 = vxor.u32 %v974, 2147483648
  %v976 = vmul.f32 %v975, 1.442695
  %v977 = vpow.pop %v976
  %v978 = vadd.f32 %v977, 1.0
  %v979 = vrcp.pop %v978
  %v980 = vmul.f32 %v978, %v979
  %v981 = vsub.f32 1.0, %v980
  %v982 = vmul.f32 %v979, %v981
  %v983 = vadd.f32 %v979, %v982
  %vm984 = vweird.f32 %v978
  %vm985 = vweird.f32 %v979
  %vm986 = vmor %vm984, %vm985
  %v987 = vsel %vm986, %v979, %v983
  %v988 = vand.u32 2147483647, %v978
  %vm989 = vcmp.eq.f32.partialorder %v988, 8.507059e+37
  %v990 = vand.u32 %v978, 2147483648
  %v991 = vor.u32 1.1754944e-38, %v990
  %v992 = vsel %vm989, %v991, %v987
  %v993 = vmul.f32 1.0, %v992
  %v994 = vtanh.pop %v974
  %v995 = vmul.f32 %v993, %v941
  %997 = vrot.lane.b32.xlu0 %v994, 64
  %v998 = vpop.permute.xlu0 %997
  %v1000 = vmul.f32 %v993, %v998
  %1002 = vrot.lane.b32.xlu0 %v1000, 32
  %v1003 = vpop.permute.xlu0 %1002
  %v1005 = vadd.f32 %v995, %v1003
  %v1006 = vtanh.pop %v1005
  %1008 = vrot.lane.b32.xlu0 %v1006, 64
  %v1009 = vpop.permute.xlu0 %1008
  %v1011 = vmul.f32 %v993, %v1009
  %v1012 = vld [vmem:[#allocation2 + $0x18] sm:$0xff]
  %1014 = vrot.lane.b32.xlu0 %v1011, 32
  %v1015 = vpop.permute.xlu0 %1014
  %v1016 = vsel %vm135, %v1015, 0
  %1018 = vmatpush.msra.mxu0 0.0
  %1019 = vmatpush.msra.mxu0 0.0
  %1020 = vmatpush.msra.mxu0 0.0
  %1021 = vmatpush.msra.mxu0 0.0
  %1022 = vmatpush.msra.mxu0 0.0
  %1023 = vmatpush.msra.mxu0 0.0
  %1024 = vmatpush.msra.mxu0 0.0
  %1025 = vmatpush.msra.mxu0 0.0
  %1026 = vmatpush.msra.mxu0 0.0
  %1027 = vmatpush.msra.mxu0 0.0
  %1028 = vmatpush.msra.mxu0 0.0
  %1029 = vmatpush.msra.mxu0 0.0
  %1030 = vmatpush.msra.mxu0 %v824
  %1031 = vmatpush.msra.mxu0 %v823
  %1032 = vmatpush.msra.mxu0 %v822
  %1033 = vmatpush.msra.mxu0 %v821
  %1034 = vmatmul.f32.gmra.mxu0 %v1016
  %v1035 = vpop.f32.mrf.mxu0
  %v1036 = vadd.f32 0.0, %v1035
  %1037 = vdwg.mxu0
  %v1038 = vadd.f32 %v1012, %v1036
  %v1039 = vxor.u32 %v1038, 2147483648
  %v1040 = vmul.f32 %v1039, 1.442695
  %v1041 = vpow.pop %v1040
  %v1042 = vadd.f32 %v1041, 1.0
  %v1043 = vrcp.pop %v1042
  %v1044 = vmul.f32 %v1042, %v1043
  %v1045 = vsub.f32 1.0, %v1044
  %v1046 = vmul.f32 %v1043, %v1045
  %v1047 = vadd.f32 %v1043, %v1046
  %vm1048 = vweird.f32 %v1042
  %vm1049 = vweird.f32 %v1043
  %vm1050 = vmor %vm1048, %vm1049
  %v1051 = vsel %vm1050, %v1043, %v1047
  %v1052 = vand.u32 2147483647, %v1042
  %vm1053 = vcmp.eq.f32.partialorder %v1052, 8.507059e+37
  %v1054 = vand.u32 %v1042, 2147483648
  %v1055 = vor.u32 1.1754944e-38, %v1054
  %v1056 = vsel %vm1053, %v1055, %v1051
  %v1057 = vmul.f32 1.0, %v1056
  %v1058 = vtanh.pop %v1038
  %v1059 = vmul.f32 %v1057, %v1005
  %1061 = vrot.lane.b32.xlu0 %v1058, 64
  %v1062 = vpop.permute.xlu0 %1061
  %v1064 = vmul.f32 %v1057, %v1062
  %1066 = vrot.lane.b32.xlu0 %v1064, 32
  %v1067 = vpop.permute.xlu0 %1066
  %v1069 = vadd.f32 %v1059, %v1067
  %v1070 = vtanh.pop %v1069
  %1072 = vrot.lane.b32.xlu0 %v1070, 64
  %v1073 = vpop.permute.xlu0 %1072
  %v1075 = vmul.f32 %v1057, %v1073
  %v1076 = vld [vmem:[#allocation2 + $0x20] sm:$0xff]
  %1078 = vrot.lane.b32.xlu0 %v1075, 32
  %v1079 = vpop.permute.xlu0 %1078
  %v1080 = vsel %vm135, %v1079, 0
  %1082 = vmatpush.msra.mxu0 0.0
  %1083 = vmatpush.msra.mxu0 0.0
  %1084 = vmatpush.msra.mxu0 0.0
  %1085 = vmatpush.msra.mxu0 0.0
  %1086 = vmatpush.msra.mxu0 0.0
  %1087 = vmatpush.msra.mxu0 0.0
  %1088 = vmatpush.msra.mxu0 0.0
  %1089 = vmatpush.msra.mxu0 0.0
  %1090 = vmatpush.msra.mxu0 0.0
  %1091 = vmatpush.msra.mxu0 0.0
  %1092 = vmatpush.msra.mxu0 0.0
  %1093 = vmatpush.msra.mxu0 0.0
  %1094 = vmatpush.msra.mxu0 %v824
  %1095 = vmatpush.msra.mxu0 %v823
  %1096 = vmatpush.msra.mxu0 %v822
  %1097 = vmatpush.msra.mxu0 %v821
  %1098 = vmatmul.f32.gmra.mxu0 %v1080
  %v1099 = vpop.f32.mrf.mxu0
  %v1100 = vadd.f32 0.0, %v1099
  %1101 = vdwg.mxu0
  %v1102 = vadd.f32 %v1076, %v1100
  %v1103 = vxor.u32 %v1102, 2147483648
  %v1104 = vmul.f32 %v1103, 1.442695
  %v1105 = vpow.pop %v1104
  %v1106 = vadd.f32 %v1105, 1.0
  %v1107 = vrcp.pop %v1106
  %v1108 = vmul.f32 %v1106, %v1107
  %v1109 = vsub.f32 1.0, %v1108
  %v1110 = vmul.f32 %v1107, %v1109
  %v1111 = vadd.f32 %v1107, %v1110
  %vm1112 = vweird.f32 %v1106
  %vm1113 = vweird.f32 %v1107
  %vm1114 = vmor %vm1112, %vm1113
  %v1115 = vsel %vm1114, %v1107, %v1111
  %v1116 = vand.u32 2147483647, %v1106
  %vm1117 = vcmp.eq.f32.partialorder %v1116, 8.507059e+37
  %v1118 = vand.u32 %v1106, 2147483648
  %v1119 = vor.u32 1.1754944e-38, %v1118
  %v1120 = vsel %vm1117, %v1119, %v1115
  %v1121 = vmul.f32 1.0, %v1120
  %v1122 = vtanh.pop %v1102
  %v1123 = vmul.f32 %v1121, %v1069
  %1125 = vrot.lane.b32.xlu0 %v1122, 64
  %v1126 = vpop.permute.xlu0 %1125
  %v1128 = vmul.f32 %v1121, %v1126
  %1130 = vrot.lane.b32.xlu0 %v1128, 32
  %v1131 = vpop.permute.xlu0 %1130
  %v1133 = vadd.f32 %v1123, %v1131
  %v1134 = vtanh.pop %v1133
  %1136 = vrot.lane.b32.xlu0 %v1134, 64
  %v1137 = vpop.permute.xlu0 %1136
  %v1139 = vmul.f32 %v1121, %v1137
  %v1140 = vld [vmem:[#allocation2 + $0x28] sm:$0xff]
  %1142 = vrot.lane.b32.xlu0 %v1139, 32
  %v1143 = vpop.permute.xlu0 %1142
  %v1144 = vsel %vm135, %v1143, 0
  %1146 = vmatpush.msra.mxu0 0.0
  %1147 = vmatpush.msra.mxu0 0.0
  %1148 = vmatpush.msra.mxu0 0.0
  %1149 = vmatpush.msra.mxu0 0.0
  %1150 = vmatpush.msra.mxu0 0.0
  %1151 = vmatpush.msra.mxu0 0.0
  %1152 = vmatpush.msra.mxu0 0.0
  %1153 = vmatpush.msra.mxu0 0.0
  %1154 = vmatpush.msra.mxu0 0.0
  %1155 = vmatpush.msra.mxu0 0.0
  %1156 = vmatpush.msra.mxu0 0.0
  %1157 = vmatpush.msra.mxu0 0.0
  %1158 = vmatpush.msra.mxu0 %v824
  %1159 = vmatpush.msra.mxu0 %v823
  %1160 = vmatpush.msra.mxu0 %v822
  %1161 = vmatpush.msra.mxu0 %v821
  %1162 = vmatmul.f32.gmra.mxu0 %v1144
  %v1163 = vpop.f32.mrf.mxu0
  %v1164 = vadd.f32 0.0, %v1163
  %1165 = vdwg.mxu0
  %v1166 = vadd.f32 %v1140, %v1164
  %v1167 = vxor.u32 %v1166, 2147483648
  %v1168 = vmul.f32 %v1167, 1.442695
  %v1169 = vpow.pop %v1168
  %v1170 = vadd.f32 %v1169, 1.0
  %v1171 = vrcp.pop %v1170
  %v1172 = vmul.f32 %v1170, %v1171
  %v1173 = vsub.f32 1.0, %v1172
  %v1174 = vmul.f32 %v1171, %v1173
  %v1175 = vadd.f32 %v1171, %v1174
  %vm1176 = vweird.f32 %v1170
  %vm1177 = vweird.f32 %v1171
  %vm1178 = vmor %vm1176, %vm1177
  %v1179 = vsel %vm1178, %v1171, %v1175
  %v1180 = vand.u32 2147483647, %v1170
  %vm1181 = vcmp.eq.f32.partialorder %v1180, 8.507059e+37
  %v1182 = vand.u32 %v1170, 2147483648
  %v1183 = vor.u32 1.1754944e-38, %v1182
  %v1184 = vsel %vm1181, %v1183, %v1179
  %v1185 = vmul.f32 1.0, %v1184
  %v1186 = vtanh.pop %v1166
  %v1187 = vmul.f32 %v1185, %v1133
  %1189 = vrot.lane.b32.xlu0 %v1186, 64
  %v1190 = vpop.permute.xlu0 %1189
  %v1192 = vmul.f32 %v1185, %v1190
  %1194 = vrot.lane.b32.xlu0 %v1192, 32
  %v1195 = vpop.permute.xlu0 %1194
  %v1197 = vadd.f32 %v1187, %v1195
  %v1198 = vtanh.pop %v1197
  %1200 = vrot.lane.b32.xlu0 %v1198, 64
  %v1201 = vpop.permute.xlu0 %1200
  %v1203 = vmul.f32 %v1185, %v1201
  %v1204 = vld [vmem:[#allocation2 + $0x30] sm:$0xff]
  %1206 = vrot.lane.b32.xlu0 %v1203, 32
  %v1207 = vpop.permute.xlu0 %1206
  %v1208 = vsel %vm135, %v1207, 0
  %1210 = vmatpush.msra.mxu0 0.0
  %1211 = vmatpush.msra.mxu0 0.0
  %1212 = vmatpush.msra.mxu0 0.0
  %1213 = vmatpush.msra.mxu0 0.0
  %1214 = vmatpush.msra.mxu0 0.0
  %1215 = vmatpush.msra.mxu0 0.0
  %1216 = vmatpush.msra.mxu0 0.0
  %1217 = vmatpush.msra.mxu0 0.0
  %1218 = vmatpush.msra.mxu0 0.0
  %1219 = vmatpush.msra.mxu0 0.0
  %1220 = vmatpush.msra.mxu0 0.0
  %1221 = vmatpush.msra.mxu0 0.0
  %1222 = vmatpush.msra.mxu0 %v824
  %1223 = vmatpush.msra.mxu0 %v823
  %1224 = vmatpush.msra.mxu0 %v822
  %1225 = vmatpush.msra.mxu0 %v821
  %1226 = vmatmul.f32.gmra.mxu0 %v1208
  %v1227 = vpop.f32.mrf.mxu0
  %v1228 = vadd.f32 0.0, %v1227
  %1229 = vdwg.mxu0
  %v1230 = vadd.f32 %v1204, %v1228
  %v1231 = vxor.u32 %v1230, 2147483648
  %v1232 = vmul.f32 %v1231, 1.442695
  %v1233 = vpow.pop %v1232
  %v1234 = vadd.f32 %v1233, 1.0
  %v1235 = vrcp.pop %v1234
  %v1236 = vmul.f32 %v1234, %v1235
  %v1237 = vsub.f32 1.0, %v1236
  %v1238 = vmul.f32 %v1235, %v1237
  %v1239 = vadd.f32 %v1235, %v1238
  %vm1240 = vweird.f32 %v1234
  %vm1241 = vweird.f32 %v1235
  %vm1242 = vmor %vm1240, %vm1241
  %v1243 = vsel %vm1242, %v1235, %v1239
  %v1244 = vand.u32 2147483647, %v1234
  %vm1245 = vcmp.eq.f32.partialorder %v1244, 8.507059e+37
  %v1246 = vand.u32 %v1234, 2147483648
  %v1247 = vor.u32 1.1754944e-38, %v1246
  %v1248 = vsel %vm1245, %v1247, %v1243
  %v1249 = vmul.f32 1.0, %v1248
  %v1250 = vtanh.pop %v1230
  %v1251 = vmul.f32 %v1249, %v1197
  %1253 = vrot.lane.b32.xlu0 %v1250, 64
  %v1254 = vpop.permute.xlu0 %1253
  %v1256 = vmul.f32 %v1249, %v1254
  %1258 = vrot.lane.b32.xlu0 %v1256, 32
  %v1259 = vpop.permute.xlu0 %1258
  %v1261 = vadd.f32 %v1251, %v1259
  %v1262 = vtanh.pop %v1261
  %1264 = vrot.lane.b32.xlu0 %v1262, 64
  %v1265 = vpop.permute.xlu0 %1264
  %v1267 = vmul.f32 %v1249, %v1265
  %v1268 = vld [vmem:[#allocation2 + $0x38] sm:$0xff]
  %1270 = vrot.lane.b32.xlu0 %v1267, 32
  %v1271 = vpop.permute.xlu0 %1270
  %v1272 = vsel %vm135, %v1271, 0
  %1274 = vmatpush.msra.mxu0 0.0
  %1275 = vmatpush.msra.mxu0 0.0
  %1276 = vmatpush.msra.mxu0 0.0
  %1277 = vmatpush.msra.mxu0 0.0
  %1278 = vmatpush.msra.mxu0 0.0
  %1279 = vmatpush.msra.mxu0 0.0
  %1280 = vmatpush.msra.mxu0 0.0
  %1281 = vmatpush.msra.mxu0 0.0
  %1282 = vmatpush.msra.mxu0 0.0
  %1283 = vmatpush.msra.mxu0 0.0
  %1284 = vmatpush.msra.mxu0 0.0
  %1285 = vmatpush.msra.mxu0 0.0
  %1286 = vmatpush.msra.mxu0 %v824
  %1287 = vmatpush.msra.mxu0 %v823
  %1288 = vmatpush.msra.mxu0 %v822
  %1289 = vmatpush.msra.mxu0 %v821
  %1290 = vmatmul.f32.gmra.mxu0 %v1272
  %v1291 = vpop.f32.mrf.mxu0
  %v1292 = vadd.f32 0.0, %v1291
  %1293 = vdwg.mxu0
  %v1294 = vadd.f32 %v1268, %v1292
  %v1295 = vxor.u32 %v1294, 2147483648
  %v1296 = vmul.f32 %v1295, 1.442695
  %v1297 = vpow.pop %v1296
  %v1298 = vadd.f32 %v1297, 1.0
  %v1299 = vrcp.pop %v1298
  %v1300 = vmul.f32 %v1298, %v1299
  %v1301 = vsub.f32 1.0, %v1300
  %v1302 = vmul.f32 %v1299, %v1301
  %v1303 = vadd.f32 %v1299, %v1302
  %vm1304 = vweird.f32 %v1298
  %vm1305 = vweird.f32 %v1299
  %vm1306 = vmor %vm1304, %vm1305
  %v1307 = vsel %vm1306, %v1299, %v1303
  %v1308 = vand.u32 2147483647, %v1298
  %vm1309 = vcmp.eq.f32.partialorder %v1308, 8.507059e+37
  %v1310 = vand.u32 %v1298, 2147483648
  %v1311 = vor.u32 1.1754944e-38, %v1310
  %v1312 = vsel %vm1309, %v1311, %v1307
  %v1313 = vmul.f32 1.0, %v1312
  %v1314 = vtanh.pop %v1294
  %v1315 = vmul.f32 %v1313, %v1261
  %1317 = vrot.lane.b32.xlu0 %v1314, 64
  %v1318 = vpop.permute.xlu0 %1317
  %v1320 = vmul.f32 %v1313, %v1318
  %1322 = vrot.lane.b32.xlu0 %v1320, 32
  %v1323 = vpop.permute.xlu0 %1322
  %v1325 = vadd.f32 %v1315, %v1323
  %v1326 = vtanh.pop %v1325
  %1328 = vrot.lane.b32.xlu0 %v1326, 64
  %v1329 = vpop.permute.xlu0 %1328
  %v1331 = vmul.f32 %v1313, %v1329
  %v1332 = vld [vmem:[%s7] sm:$0xff]
  %v1333 = vld [vmem:[%s7 + $0x8] sm:$0xff]
  %v1334 = vld [vmem:[%s7 + $0x10] sm:$0xff]
  %v1335 = vld [vmem:[%s7 + $0x18] sm:$0xff]
  %v1336 = vld [vmem:[#allocation3] sm:$0x1]
  %v1338 = vperm.slane %v1336, 0
  %1341 = vrot.lane.b32.xlu0 %v1331, 32
  %v1342 = vpop.permute.xlu0 %1341
  %v1343 = vsel %vm135, %v1342, 0
  %1345 = vmatpush.msra.mxu0 0.0
  %1346 = vmatpush.msra.mxu0 0.0
  %1347 = vmatpush.msra.mxu0 0.0
  %1348 = vmatpush.msra.mxu0 0.0
  %1349 = vmatpush.msra.mxu0 0.0
  %1350 = vmatpush.msra.mxu0 0.0
  %1351 = vmatpush.msra.mxu0 0.0
  %1352 = vmatpush.msra.mxu0 0.0
  %1353 = vmatpush.msra.mxu0 0.0
  %1354 = vmatpush.msra.mxu0 0.0
  %1355 = vmatpush.msra.mxu0 0.0
  %1356 = vmatpush.msra.mxu0 0.0
  %1357 = vmatpush.msra.mxu0 %v1335
  %1358 = vmatpush.msra.mxu0 %v1334
  %1359 = vmatpush.msra.mxu0 %v1333
  %1360 = vmatpush.msra.mxu0 %v1332
  %1361 = vmatmul.f32.gmra.mxu0 %v1343
  %v1362 = vpop.f32.mrf.mxu0
  %v1363 = vadd.f32 %v1338, %v1362
  %1364 = vdwg.mxu0
  %vm1365 = vcmask 1024
  %1366 = vst.msk [vmem:[%s9] sm:$0x3] %vm1365, %v1363
  // Predicated region
  $region38: #{tpu_custom_call.1} parent=0 // pred_check
    _
  $region39: #{tpu_custom_call.1} parent=0 // pred_check_branch
    %1368 = sbr.rel (0) target = $region41
  $region40: #{tpu_custom_call.1} parent=0 // pred_region
    _
  $region41: #{tpu_custom_call.1} parent=0 // pred_fallthru
    _
  // Predicated region
  $region42: #{tpu_custom_call.1} parent=0 // pred_check
    _
  $region43: #{tpu_custom_call.1} parent=0 // pred_check_branch
    %1370 = sbr.rel (0) target = $region45
  $region44: #{tpu_custom_call.1} parent=0 // pred_region
    _
  $region45: #{tpu_custom_call.1} parent=0 // pred_fallthru
    _

</llo_original>
